<compile_context>
chip_gen: v7x
topology: tpu7x:2x2x1
jax: 0.10.0
libtpu: 0.0.40
codegen_flags: <defaults>
</compile_context>

<pallas_src>
import functools

import jax
import jax.numpy as jnp
import numpy as np
from jax.experimental import pallas as pl
from jax.experimental.pallas import tpu as pltpu


# ----------------------------- Pallas kernel ---------------------------------
def _dws_kernel(x_ref, w1_ref, b1_ref, a1_ref,
                wdw_ref, b2_ref, a2_ref,
                w3_ref, b3_ref,
                wfc1t_ref, wfc2_ref,
                o_ref, *, H, W, Nb, residual):
    HW = H * W
    R = Nb * HW
    Cin = x_ref.shape[-1]
    Cout = o_ref.shape[-1]

    # --- Conv_block 1: 1x1 conv (BN scale pre-folded) + bias + PReLU ---------
    # bf16 MXU inputs, fp32 accumulation; the fp32 input value is not kept live.
    y = jnp.dot(x_ref[...].reshape(R, Cin).astype(jnp.bfloat16), w1_ref[...],
                preferred_element_type=jnp.float32)      # (R, G)
    y = y + b1_ref[...]
    y = jnp.where(y >= 0, y, a1_ref[...] * y)

    # --- Conv_block 2: depthwise 3x3, stride (1,1), pad (1,1), BN folded -----
    # TODO(synk): stride != (1,1) not implemented (SE/residual path needs stride 1).
    # Taps: 2 fine rolls (+-1 along the flat row axis) + 6 coarse +-W rolls of the
    # pre-rolled rows.  Zero padding realized with per-image edge masks (hoisted).
    def sroll(a, d):
        # tap[r] = a[r + d] (wraps across the block; edges masked below)
        return a if d == 0 else pltpu.roll(a, shift=(-d) % R, axis=0)

    y_l = sroll(y, -1)                   # dw = -1
    y_r = sroll(y, +1)                   # dw = +1
    base = {-1: y_l, 0: y, 1: y_r}
    taps = {}
    for dw in (-1, 0, 1):
        taps[(-1, dw)] = sroll(base[dw], -W)     # dh = -1
        taps[(0, dw)] = base[dw]                 # dh =  0
        taps[(1, dw)] = sroll(base[dw], +W)      # dh = +1

    # Boundary masks, computed once (no int division; rems are ANDs for pow2 W/HW).
    flat = jax.lax.broadcasted_iota(jnp.int32, (R, 1), 0)
    pos = flat % HW                       # index within each image
    col = flat % W                        # column within each row (HW % W == 0)
    row_ok = {-1: pos >= W, 0: None, 1: pos < HW - W}
    col_ok = {-1: col >= 1, 0: None, 1: col <= W - 2}

    wdw = wdw_ref[...]                                   # (9, G) fp32
    acc = y * wdw[4][None, :]                            # center tap, no mask
    for dh in (-1, 0, 1):
        for dw in (-1, 0, 1):
            if dh == 0 and dw == 0:
                continue
            tap = taps[(dh, dw)]
            rm, cm = row_ok[dh], col_ok[dw]
            mask = rm if cm is None else (cm if rm is None else (rm & cm))
            tap = jnp.where(mask, tap, 0.0)
            acc = acc + tap * wdw[(dh + 1) * 3 + (dw + 1)][None, :]
    y = acc + b2_ref[...]
    y = jnp.where(y >= 0, y, a2_ref[...] * y)

    # --- Linear_block: 1x1 conv (BN scale pre-folded) + bias -----------------
    y = jnp.dot(y.astype(jnp.bfloat16), w3_ref[...],
                preferred_element_type=jnp.float32)      # (R, Cout)
    y = y + b3_ref[...]

    if residual:
        # --- SEModule on the VPU/XLU (no M=1 MXU matmuls) --------------------
        y3 = y.reshape(Nb, HW, Cout)
        s = jnp.mean(y3, axis=1, keepdims=True)                          # (Nb,1,C)
        h = jnp.sum(wfc1t_ref[...][None] * s, axis=-1, keepdims=True)    # (Nb,mid,1)
        h = jnp.maximum(h, 0.0)
        g = jax.nn.sigmoid(
            jnp.sum(wfc2_ref[...][None] * h, axis=1, keepdims=True))     # (Nb,1,C)
        short = x_ref[...]               # re-read input block just before the add
        o_ref[...] = short + y3 * g      # residual (Cin == Cout)
    else:
        o_ref[...] = y.reshape(Nb, HW, Cout)


# ------------------------------ wrappers --------------------------------------
def _full_spec(arr):
    nd = arr.ndim
    return pl.BlockSpec(arr.shape, lambda n, _nd=nd: (0,) * _nd)


def fold_params(p):
    """One-time (model-load) weight prep: fold eval-mode BN scales into the conv
    weights, cast matmul weights to bf16, pre-transpose the SE fc1 weight."""
    return {
        "w1": (p["w1"] * p["bn1_s"]).astype(jnp.bfloat16),      # (Cin, G)
        "b1": p["bn1_b"].astype(jnp.float32),                   # (1, G)
        "a1": p["pr1"].astype(jnp.float32),                     # (1, G)
        "wdw": (p["wdw"] * p["bn2_s"]).astype(jnp.float32),     # (9, G)
        "b2": p["bn2_b"].astype(jnp.float32),                   # (1, G)
        "a2": p["pr2"].astype(jnp.float32),                     # (1, G)
        "w3": (p["w3"] * p["bn3_s"]).astype(jnp.bfloat16),      # (G, Cout)
        "b3": p["bn3_b"].astype(jnp.float32),                   # (1, Cout)
        "wfc1t": jnp.transpose(p["wfc1"]).astype(jnp.float32),  # (mid, Cout)
        "wfc2": p["wfc2"].astype(jnp.float32),                  # (mid, Cout)
    }


_VMEM_BUDGET = 40 * 1024 * 1024   # per-step footprint cap; keeps v7x's 64 MiB VMEM safe


def _step_bytes(nb, HW, Cin, G, Cout):
    r = nb * HW
    # 2x double-buffered in/out blocks + ~5 live (R, max(G,Cout)) fp32 intermediates
    return 4 * (2 * r * Cin + 2 * r * Cout + 5 * r * max(G, Cout))


def _choose_batch_block(N, HW, Cin, G, Cout):
    """Rows/step target ~512-2048, >= 2 grid steps per TensorCore when possible,
    capped by the per-step VMEM budget; result divides N."""
    nb = max(1, min(N, max(1, 1024 // HW)))
    while nb > 1 and N // nb < min(N, 4):
        nb -= 1
    while nb > 1 and _step_bytes(nb, HW, Cin, G, Cout) > _VMEM_BUDGET:
        nb -= 1
    while N % nb:
        nb -= 1
    return nb


def depth_wise_se_nhwc(x_nhwc, fp, *, residual=True, stride=(1, 1), batch_block=None):
    """Core op on NHWC activations. `fp` must come from fold_params()."""
    if stride != (1, 1):
        # TODO(synk): strided (downsampling, non-residual) depthwise path not implemented.
        raise NotImplementedError("only stride (1, 1) is implemented")
    N, H, W, Cin = x_nhwc.shape
    G = fp["w1"].shape[1]
    Cout = fp["w3"].shape[1]
    mid = fp["wfc1t"].shape[0]
    if residual:
        assert Cin == Cout, "residual path requires in_c == out_c"
    HW = H * W

    Nb = batch_block if batch_block is not None else _choose_batch_block(N, HW, Cin, G, Cout)
    assert N % Nb == 0

    # True-width activation DMA: no channel padding, no post-kernel slice.
    x = x_nhwc.reshape(N, HW, Cin)

    weights = [fp["w1"], fp["b1"], fp["a1"], fp["wdw"], fp["b2"], fp["a2"],
               fp["w3"], fp["b3"], fp["wfc1t"], fp["wfc2"]]

    flops = 2 * N * HW * (Cin * G + 9 * G + G * Cout) + 4 * N * Cout * mid
    bytes_accessed = int(N * HW * (Cin + Cout) * 4
                         + sum(int(w.size) * w.dtype.itemsize for w in weights))

    vmem_limit = int(min(48 * 1024 * 1024,
                         max(16 * 1024 * 1024, 2 * _step_bytes(Nb, HW, Cin, G, Cout))))

    kernel = functools.partial(_dws_kernel, H=H, W=W, Nb=Nb, residual=residual)
    out = pl.pallas_call(
        kernel,
        out_shape=jax.ShapeDtypeStruct((N, HW, Cout), jnp.float32),
        grid_spec=pltpu.PrefetchScalarGridSpec(
            num_scalar_prefetch=0,
            grid=(N // Nb,),
            in_specs=[pl.BlockSpec((Nb, HW, Cin), lambda n: (n, 0, 0))]
                     + [_full_spec(w) for w in weights],
            out_specs=pl.BlockSpec((Nb, HW, Cout), lambda n: (n, 0, 0)),
        ),
        compiler_params=pltpu.CompilerParams(
            dimension_semantics=("parallel",),
            vmem_limit_bytes=vmem_limit,
        ),
        cost_estimate=pl.CostEstimate(
            flops=int(flops),
            transcendentals=int(N * Cout),
            bytes_accessed=bytes_accessed),
    )(x, *weights)
    return out.reshape(N, H, W, Cout)


def depth_wise_se(x_nchw, fp, *, residual=True, stride=(1, 1), batch_block=None):
    # NOTE: in a full network keep activations NHWC end-to-end; these transposes
    # are layout plumbing for the PyTorch NCHW interface only.
    x_nhwc = jnp.transpose(x_nchw, (0, 2, 3, 1))
    out = depth_wise_se_nhwc(x_nhwc, fp, residual=residual, stride=stride,
                             batch_block=batch_block)
    return jnp.transpose(out, (0, 3, 1, 2))


# --------------------------- pure-JAX reference --------------------------------
def reference(x, p, *, residual=True):
    dn = ("NCHW", "OIHW", "NCHW")
    hp = jax.lax.Precision.HIGHEST
    G = p["w1"].shape[1]

    def aff(y, s, b):
        return y * s[0][None, :, None, None] + b[0][None, :, None, None]

    def prelu(y, a):
        return jnp.where(y >= 0, y, a[0][None, :, None, None] * y)

    w1 = jnp.transpose(p["w1"])[:, :, None, None]           # (G, Cin, 1, 1)
    y = jax.lax.conv_general_dilated(x, w1, (1, 1), "VALID",
                                     dimension_numbers=dn, precision=hp)
    y = prelu(aff(y, p["bn1_s"], p["bn1_b"]), p["pr1"])

    wdw = jnp.transpose(p["wdw"]).reshape(G, 1, 3, 3)        # (G, 1, 3, 3)
    y = jax.lax.conv_general_dilated(y, wdw, (1, 1), ((1, 1), (1, 1)),
                                     dimension_numbers=dn,
                                     feature_group_count=G, precision=hp)
    y = prelu(aff(y, p["bn2_s"], p["bn2_b"]), p["pr2"])

    w3 = jnp.transpose(p["w3"])[:, :, None, None]            # (Cout, G, 1, 1)
    y = jax.lax.conv_general_dilated(y, w3, (1, 1), "VALID",
                                     dimension_numbers=dn, precision=hp)
    y = aff(y, p["bn3_s"], p["bn3_b"])

    if residual:
        s = jnp.mean(y, axis=(2, 3), keepdims=True)          # (N, Cout, 1, 1)
        h = jnp.maximum(jnp.einsum("ncij,cm->nmij", s, p["wfc1"], precision=hp), 0.0)
        g = jax.nn.sigmoid(jnp.einsum("nmij,mc->ncij", h, p["wfc2"], precision=hp))
        y = x + y * g
    return y


# --------------------------- deterministic params ------------------------------
def make_params(key, Cin, G, Cout, se_reduct):
    mid = Cout // se_reduct
    ks = jax.random.split(key, 11)

    def nrm(k, shape, s=0.2):
        return (s * jax.random.normal(k, shape)).astype(jnp.float32)

    # BatchNorm (eval mode) is a per-channel affine; folded scale/bias generated directly.
    return {
        "w1": nrm(ks[0], (Cin, G)),
        "bn1_s": 1.0 + nrm(ks[1], (1, G), 0.1), "bn1_b": nrm(ks[2], (1, G), 0.1),
        "pr1": jnp.full((1, G), 0.25, jnp.float32),
        "wdw": nrm(ks[3], (9, G)),
        "bn2_s": 1.0 + nrm(ks[4], (1, G), 0.1), "bn2_b": nrm(ks[5], (1, G), 0.1),
        "pr2": jnp.full((1, G), 0.25, jnp.float32),
        "w3": nrm(ks[6], (G, Cout)),
        "bn3_s": 1.0 + nrm(ks[7], (1, Cout), 0.1), "bn3_b": nrm(ks[8], (1, Cout), 0.1),
        "wfc1": nrm(ks[9], (Cout, mid)),
        "wfc2": nrm(ks[10], (mid, Cout)),
    }


if __name__ == "__main__":
    key = jax.random.PRNGKey(0)
    kx, kp = jax.random.split(key)

    # Depth_Wise_SE(in_c=16, out_c=16, residual=True, kernel=(3,3), stride=(1,1),
    #               padding=(1,1), groups=32, se_reduct=4)
    N, Cin, H, W = 4, 16, 8, 8
    G, Cout, se_reduct = 32, 16, 4

    x = jax.random.normal(kx, (N, Cin, H, W), jnp.float32)
    p = make_params(kp, Cin, G, Cout, se_reduct)
    fp = fold_params(p)          # one-time weight folding (model-load time)

    out = depth_wise_se(x, fp, residual=True)
    out = jax.block_until_ready(out)

    ref = reference(x, p, residual=True)
    np.testing.assert_allclose(np.asarray(out), np.asarray(ref), atol=1e-2, rtol=1e-2)
    print("KERNEL_OK")
</pallas_src>

<mosaic_0001>
module attributes {stable_mosaic.version = 11 : i64} {
  func.func @_dws_kernel(%arg0: i32, %arg1: memref<1x64x16xf32, #tpu.memory_space<vmem>>, %arg2: memref<16x32xbf16, #tpu.memory_space<vmem>>, %arg3: memref<1x32xf32, #tpu.memory_space<vmem>>, %arg4: memref<1x32xf32, #tpu.memory_space<vmem>>, %arg5: memref<9x32xf32, #tpu.memory_space<vmem>>, %arg6: memref<1x32xf32, #tpu.memory_space<vmem>>, %arg7: memref<1x32xf32, #tpu.memory_space<vmem>>, %arg8: memref<32x16xbf16, #tpu.memory_space<vmem>>, %arg9: memref<1x16xf32, #tpu.memory_space<vmem>>, %arg10: memref<4x16xf32, #tpu.memory_space<vmem>>, %arg11: memref<4x16xf32, #tpu.memory_space<vmem>>, %arg12: memref<1x64x16xf32, #tpu.memory_space<vmem>>) attributes {dimension_semantics = [#tpu.dimension_semantics<parallel>], iteration_bounds = array<i64: 4>, scalar_prefetch = 0 : i64, scratch_operands = 0 : i64, tpu.core_type = #tpu.core_type<tc>, window_params = [{transform_indices = @transform_0, window_bounds = array<i64: 1, 64, 16>}, {pipeline_mode = #tpu.pipeline_mode<synchronous>, transform_indices = @transform_1, window_bounds = array<i64: 16, 32>}, {pipeline_mode = #tpu.pipeline_mode<synchronous>, transform_indices = @transform_2, window_bounds = array<i64: 1, 32>}, {pipeline_mode = #tpu.pipeline_mode<synchronous>, transform_indices = @transform_3, window_bounds = array<i64: 1, 32>}, {pipeline_mode = #tpu.pipeline_mode<synchronous>, transform_indices = @transform_4, window_bounds = array<i64: 9, 32>}, {pipeline_mode = #tpu.pipeline_mode<synchronous>, transform_indices = @transform_5, window_bounds = array<i64: 1, 32>}, {pipeline_mode = #tpu.pipeline_mode<synchronous>, transform_indices = @transform_6, window_bounds = array<i64: 1, 32>}, {pipeline_mode = #tpu.pipeline_mode<synchronous>, transform_indices = @transform_7, window_bounds = array<i64: 32, 16>}, {pipeline_mode = #tpu.pipeline_mode<synchronous>, transform_indices = @transform_8, window_bounds = array<i64: 1, 16>}, {pipeline_mode = #tpu.pipeline_mode<synchronous>, transform_indices = @transform_9, window_bounds = array<i64: 4, 16>}, {pipeline_mode = #tpu.pipeline_mode<synchronous>, transform_indices = @transform_10, window_bounds = array<i64: 4, 16>}, {transform_indices = @transform_11, window_bounds = array<i64: 1, 64, 16>}]} {
    %c0 = arith.constant 0 : index
    %c0_0 = arith.constant 0 : index
    %c0_1 = arith.constant 0 : index
    %0 = vector.load %arg1[%c0, %c0_0, %c0_1] : memref<1x64x16xf32, #tpu.memory_space<vmem>>, vector<1x64x16xf32>
    %1 = vector.shape_cast %0 : vector<1x64x16xf32> to vector<64x16xf32>
    %2 = arith.truncf %1 : vector<64x16xf32> to vector<64x16xbf16>
    %c0_2 = arith.constant 0 : index
    %c0_3 = arith.constant 0 : index
    %3 = vector.load %arg2[%c0_2, %c0_3] : memref<16x32xbf16, #tpu.memory_space<vmem>>, vector<16x32xbf16>
    %cst = arith.constant dense<0.000000e+00> : vector<64x32xf32>
    %4 = tpu.matmul %2, %3, %cst {dimension_numbers = #tpu.dot_dimension_numbers<[1], [0], [0], [1], [0, 0, 1, 1], [], []>} : vector<64x16xbf16>, vector<16x32xbf16>, vector<64x32xf32> -> vector<64x32xf32>
    %c0_4 = arith.constant 0 : index
    %c0_5 = arith.constant 0 : index
    %5 = vector.load %arg3[%c0_4, %c0_5] : memref<1x32xf32, #tpu.memory_space<vmem>>, vector<1x32xf32>
    %6 = vector.broadcast %5 : vector<1x32xf32> to vector<64x32xf32>
    %7 = arith.addf %4, %6 : vector<64x32xf32>
    %cst_6 = arith.constant 0.000000e+00 : f32
    %8 = vector.broadcast %cst_6 : f32 to vector<64x32xf32>
    %9 = arith.cmpf oge, %7, %8 : vector<64x32xf32>
    %c0_7 = arith.constant 0 : index
    %c0_8 = arith.constant 0 : index
    %10 = vector.load %arg4[%c0_7, %c0_8] : memref<1x32xf32, #tpu.memory_space<vmem>>, vector<1x32xf32>
    %11 = vector.broadcast %10 : vector<1x32xf32> to vector<64x32xf32>
    %12 = arith.mulf %11, %7 : vector<64x32xf32>
    %13 = arith.select %9, %7, %12 : vector<64x32xi1>, vector<64x32xf32>
    %c1_i32 = arith.constant 1 : i32
    %14 = tpu.dynamic_rotate %13 by %c1_i32 dim 0 : vector<64x32xf32>, i32 -> vector<64x32xf32>
    %c63_i32 = arith.constant 63 : i32
    %15 = tpu.dynamic_rotate %13 by %c63_i32 dim 0 : vector<64x32xf32>, i32 -> vector<64x32xf32>
    %c8_i32 = arith.constant 8 : i32
    %16 = tpu.dynamic_rotate %14 by %c8_i32 dim 0 : vector<64x32xf32>, i32 -> vector<64x32xf32>
    %c56_i32 = arith.constant 56 : i32
    %17 = tpu.dynamic_rotate %14 by %c56_i32 dim 0 : vector<64x32xf32>, i32 -> vector<64x32xf32>
    %c8_i32_9 = arith.constant 8 : i32
    %18 = tpu.dynamic_rotate %13 by %c8_i32_9 dim 0 : vector<64x32xf32>, i32 -> vector<64x32xf32>
    %c56_i32_10 = arith.constant 56 : i32
    %19 = tpu.dynamic_rotate %13 by %c56_i32_10 dim 0 : vector<64x32xf32>, i32 -> vector<64x32xf32>
    %c8_i32_11 = arith.constant 8 : i32
    %20 = tpu.dynamic_rotate %15 by %c8_i32_11 dim 0 : vector<64x32xf32>, i32 -> vector<64x32xf32>
    %c56_i32_12 = arith.constant 56 : i32
    %21 = tpu.dynamic_rotate %15 by %c56_i32_12 dim 0 : vector<64x32xf32>, i32 -> vector<64x32xf32>
    %22 = tpu.iota {dimensions = array<i32: 0>} : vector<64x1xi32>
    %c64_i32 = arith.constant 64 : i32
    %c0_i32 = arith.constant 0 : i32
    %23 = arith.cmpi eq, %c64_i32, %c0_i32 : i32
    %c1_i32_13 = arith.constant 1 : i32
    %24 = arith.select %23, %c1_i32_13, %c64_i32 : i32
    %25 = vector.broadcast %24 : i32 to vector<64x1xi32>
    %26 = arith.remsi %22, %25 : vector<64x1xi32>
    %c0_i32_14 = arith.constant 0 : i32
    %27 = vector.broadcast %c0_i32_14 : i32 to vector<64x1xi32>
    %28 = arith.cmpi ne, %26, %27 : vector<64x1xi32>
    %c0_i32_15 = arith.constant 0 : i32
    %29 = vector.broadcast %c0_i32_15 : i32 to vector<64x1xi32>
    %30 = arith.cmpi slt, %26, %29 : vector<64x1xi32>
    %c0_i32_16 = arith.constant 0 : i32
    %31 = arith.cmpi slt, %24, %c0_i32_16 : i32
    %32 = vector.broadcast %31 : i1 to vector<64x1xi1>
    %33 = vector.broadcast %32 : vector<64x1xi1> to vector<64x1xi1>
    %34 = arith.xori %30, %33 : vector<64x1xi1>
    %35 = arith.andi %34, %28 : vector<64x1xi1>
    %36 = vector.broadcast %24 : i32 to vector<64x1xi32>
    %37 = arith.addi %26, %36 : vector<64x1xi32>
    %38 = arith.select %35, %37, %26 : vector<64x1xi1>, vector<64x1xi32>
    %c8_i32_17 = arith.constant 8 : i32
    %c0_i32_18 = arith.constant 0 : i32
    %39 = arith.cmpi eq, %c8_i32_17, %c0_i32_18 : i32
    %c1_i32_19 = arith.constant 1 : i32
    %40 = arith.select %39, %c1_i32_19, %c8_i32_17 : i32
    %41 = vector.broadcast %40 : i32 to vector<64x1xi32>
    %42 = arith.remsi %22, %41 : vector<64x1xi32>
    %c0_i32_20 = arith.constant 0 : i32
    %43 = vector.broadcast %c0_i32_20 : i32 to vector<64x1xi32>
    %44 = arith.cmpi ne, %42, %43 : vector<64x1xi32>
    %c0_i32_21 = arith.constant 0 : i32
    %45 = vector.broadcast %c0_i32_21 : i32 to vector<64x1xi32>
    %46 = arith.cmpi slt, %42, %45 : vector<64x1xi32>
    %c0_i32_22 = arith.constant 0 : i32
    %47 = arith.cmpi slt, %40, %c0_i32_22 : i32
    %48 = vector.broadcast %47 : i1 to vector<64x1xi1>
    %49 = vector.broadcast %48 : vector<64x1xi1> to vector<64x1xi1>
    %50 = arith.xori %46, %49 : vector<64x1xi1>
    %51 = arith.andi %50, %44 : vector<64x1xi1>
    %52 = vector.broadcast %40 : i32 to vector<64x1xi32>
    %53 = arith.addi %42, %52 : vector<64x1xi32>
    %54 = arith.select %51, %53, %42 : vector<64x1xi1>, vector<64x1xi32>
    %c8_i32_23 = arith.constant 8 : i32
    %55 = vector.broadcast %c8_i32_23 : i32 to vector<64x1xi32>
    %56 = arith.cmpi sge, %38, %55 : vector<64x1xi32>
    %c56_i32_24 = arith.constant 56 : i32
    %57 = vector.broadcast %c56_i32_24 : i32 to vector<64x1xi32>
    %58 = arith.cmpi slt, %38, %57 : vector<64x1xi32>
    %c1_i32_25 = arith.constant 1 : i32
    %59 = vector.broadcast %c1_i32_25 : i32 to vector<64x1xi32>
    %60 = arith.cmpi sge, %54, %59 : vector<64x1xi32>
    %c6_i32 = arith.constant 6 : i32
    %61 = vector.broadcast %c6_i32 : i32 to vector<64x1xi32>
    %62 = arith.cmpi sle, %54, %61 : vector<64x1xi32>
    %c0_26 = arith.constant 0 : index
    %c0_27 = arith.constant 0 : index
    %63 = vector.load %arg5[%c0_26, %c0_27] : memref<9x32xf32, #tpu.memory_space<vmem>>, vector<9x32xf32>
    %64 = vector.extract_strided_slice %63 {offsets = [4, 0], sizes = [1, 32], strides = [1, 1]} : vector<9x32xf32> to vector<1x32xf32>
    %65 = vector.shape_cast %64 : vector<1x32xf32> to vector<32xf32>
    %66 = vector.shape_cast %65 : vector<32xf32> to vector<1x32xf32>
    %67 = vector.broadcast %66 : vector<1x32xf32> to vector<64x32xf32>
    %68 = arith.mulf %13, %67 : vector<64x32xf32>
    %69 = arith.andi %56, %60 : vector<64x1xi1>
    %cst_28 = arith.constant 0.000000e+00 : f32
    %70 = vector.shape_cast %69 : vector<64x1xi1> to vector<64x1xi1>
    %71 = vector.broadcast %70 : vector<64x1xi1> to vector<64x32xi1>
    %72 = vector.broadcast %cst_28 : f32 to vector<64x32xf32>
    %73 = arith.select %71, %16, %72 : vector<64x32xi1>, vector<64x32xf32>
    %74 = vector.extract_strided_slice %63 {offsets = [0, 0], sizes = [1, 32], strides = [1, 1]} : vector<9x32xf32> to vector<1x32xf32>
    %75 = vector.shape_cast %74 : vector<1x32xf32> to vector<32xf32>
    %76 = vector.shape_cast %75 : vector<32xf32> to vector<1x32xf32>
    %77 = vector.broadcast %76 : vector<1x32xf32> to vector<64x32xf32>
    %78 = arith.mulf %73, %77 : vector<64x32xf32>
    %79 = arith.addf %68, %78 : vector<64x32xf32>
    %cst_29 = arith.constant 0.000000e+00 : f32
    %80 = vector.shape_cast %56 : vector<64x1xi1> to vector<64x1xi1>
    %81 = vector.broadcast %80 : vector<64x1xi1> to vector<64x32xi1>
    %82 = vector.broadcast %cst_29 : f32 to vector<64x32xf32>
    %83 = arith.select %81, %18, %82 : vector<64x32xi1>, vector<64x32xf32>
    %84 = vector.extract_strided_slice %63 {offsets = [1, 0], sizes = [1, 32], strides = [1, 1]} : vector<9x32xf32> to vector<1x32xf32>
    %85 = vector.shape_cast %84 : vector<1x32xf32> to vector<32xf32>
    %86 = vector.shape_cast %85 : vector<32xf32> to vector<1x32xf32>
    %87 = vector.broadcast %86 : vector<1x32xf32> to vector<64x32xf32>
    %88 = arith.mulf %83, %87 : vector<64x32xf32>
    %89 = arith.addf %79, %88 : vector<64x32xf32>
    %90 = arith.andi %56, %62 : vector<64x1xi1>
    %cst_30 = arith.constant 0.000000e+00 : f32
    %91 = vector.shape_cast %90 : vector<64x1xi1> to vector<64x1xi1>
    %92 = vector.broadcast %91 : vector<64x1xi1> to vector<64x32xi1>
    %93 = vector.broadcast %cst_30 : f32 to vector<64x32xf32>
    %94 = arith.select %92, %20, %93 : vector<64x32xi1>, vector<64x32xf32>
    %95 = vector.extract_strided_slice %63 {offsets = [2, 0], sizes = [1, 32], strides = [1, 1]} : vector<9x32xf32> to vector<1x32xf32>
    %96 = vector.shape_cast %95 : vector<1x32xf32> to vector<32xf32>
    %97 = vector.shape_cast %96 : vector<32xf32> to vector<1x32xf32>
    %98 = vector.broadcast %97 : vector<1x32xf32> to vector<64x32xf32>
    %99 = arith.mulf %94, %98 : vector<64x32xf32>
    %100 = arith.addf %89, %99 : vector<64x32xf32>
    %cst_31 = arith.constant 0.000000e+00 : f32
    %101 = vector.shape_cast %60 : vector<64x1xi1> to vector<64x1xi1>
    %102 = vector.broadcast %101 : vector<64x1xi1> to vector<64x32xi1>
    %103 = vector.broadcast %cst_31 : f32 to vector<64x32xf32>
    %104 = arith.select %102, %14, %103 : vector<64x32xi1>, vector<64x32xf32>
    %105 = vector.extract_strided_slice %63 {offsets = [3, 0], sizes = [1, 32], strides = [1, 1]} : vector<9x32xf32> to vector<1x32xf32>
    %106 = vector.shape_cast %105 : vector<1x32xf32> to vector<32xf32>
    %107 = vector.shape_cast %106 : vector<32xf32> to vector<1x32xf32>
    %108 = vector.broadcast %107 : vector<1x32xf32> to vector<64x32xf32>
    %109 = arith.mulf %104, %108 : vector<64x32xf32>
    %110 = arith.addf %100, %109 : vector<64x32xf32>
    %cst_32 = arith.constant 0.000000e+00 : f32
    %111 = vector.shape_cast %62 : vector<64x1xi1> to vector<64x1xi1>
    %112 = vector.broadcast %111 : vector<64x1xi1> to vector<64x32xi1>
    %113 = vector.broadcast %cst_32 : f32 to vector<64x32xf32>
    %114 = arith.select %112, %15, %113 : vector<64x32xi1>, vector<64x32xf32>
    %115 = vector.extract_strided_slice %63 {offsets = [5, 0], sizes = [1, 32], strides = [1, 1]} : vector<9x32xf32> to vector<1x32xf32>
    %116 = vector.shape_cast %115 : vector<1x32xf32> to vector<32xf32>
    %117 = vector.shape_cast %116 : vector<32xf32> to vector<1x32xf32>
    %118 = vector.broadcast %117 : vector<1x32xf32> to vector<64x32xf32>
    %119 = arith.mulf %114, %118 : vector<64x32xf32>
    %120 = arith.addf %110, %119 : vector<64x32xf32>
    %121 = arith.andi %58, %60 : vector<64x1xi1>
    %cst_33 = arith.constant 0.000000e+00 : f32
    %122 = vector.shape_cast %121 : vector<64x1xi1> to vector<64x1xi1>
    %123 = vector.broadcast %122 : vector<64x1xi1> to vector<64x32xi1>
    %124 = vector.broadcast %cst_33 : f32 to vector<64x32xf32>
    %125 = arith.select %123, %17, %124 : vector<64x32xi1>, vector<64x32xf32>
    %126 = vector.extract_strided_slice %63 {offsets = [6, 0], sizes = [1, 32], strides = [1, 1]} : vector<9x32xf32> to vector<1x32xf32>
    %127 = vector.shape_cast %126 : vector<1x32xf32> to vector<32xf32>
    %128 = vector.shape_cast %127 : vector<32xf32> to vector<1x32xf32>
    %129 = vector.broadcast %128 : vector<1x32xf32> to vector<64x32xf32>
    %130 = arith.mulf %125, %129 : vector<64x32xf32>
    %131 = arith.addf %120, %130 : vector<64x32xf32>
    %cst_34 = arith.constant 0.000000e+00 : f32
    %132 = vector.shape_cast %58 : vector<64x1xi1> to vector<64x1xi1>
    %133 = vector.broadcast %132 : vector<64x1xi1> to vector<64x32xi1>
    %134 = vector.broadcast %cst_34 : f32 to vector<64x32xf32>
    %135 = arith.select %133, %19, %134 : vector<64x32xi1>, vector<64x32xf32>
    %136 = vector.extract_strided_slice %63 {offsets = [7, 0], sizes = [1, 32], strides = [1, 1]} : vector<9x32xf32> to vector<1x32xf32>
    %137 = vector.shape_cast %136 : vector<1x32xf32> to vector<32xf32>
    %138 = vector.shape_cast %137 : vector<32xf32> to vector<1x32xf32>
    %139 = vector.broadcast %138 : vector<1x32xf32> to vector<64x32xf32>
    %140 = arith.mulf %135, %139 : vector<64x32xf32>
    %141 = arith.addf %131, %140 : vector<64x32xf32>
    %142 = arith.andi %58, %62 : vector<64x1xi1>
    %cst_35 = arith.constant 0.000000e+00 : f32
    %143 = vector.shape_cast %142 : vector<64x1xi1> to vector<64x1xi1>
    %144 = vector.broadcast %143 : vector<64x1xi1> to vector<64x32xi1>
    %145 = vector.broadcast %cst_35 : f32 to vector<64x32xf32>
    %146 = arith.select %144, %21, %145 : vector<64x32xi1>, vector<64x32xf32>
    %147 = vector.extract_strided_slice %63 {offsets = [8, 0], sizes = [1, 32], strides = [1, 1]} : vector<9x32xf32> to vector<1x32xf32>
    %148 = vector.shape_cast %147 : vector<1x32xf32> to vector<32xf32>
    %149 = vector.shape_cast %148 : vector<32xf32> to vector<1x32xf32>
    %150 = vector.broadcast %149 : vector<1x32xf32> to vector<64x32xf32>
    %151 = arith.mulf %146, %150 : vector<64x32xf32>
    %152 = arith.addf %141, %151 : vector<64x32xf32>
    %c0_36 = arith.constant 0 : index
    %c0_37 = arith.constant 0 : index
    %153 = vector.load %arg6[%c0_36, %c0_37] : memref<1x32xf32, #tpu.memory_space<vmem>>, vector<1x32xf32>
    %154 = vector.broadcast %153 : vector<1x32xf32> to vector<64x32xf32>
    %155 = arith.addf %152, %154 : vector<64x32xf32>
    %cst_38 = arith.constant 0.000000e+00 : f32
    %156 = vector.broadcast %cst_38 : f32 to vector<64x32xf32>
    %157 = arith.cmpf oge, %155, %156 : vector<64x32xf32>
    %c0_39 = arith.constant 0 : index
    %c0_40 = arith.constant 0 : index
    %158 = vector.load %arg7[%c0_39, %c0_40] : memref<1x32xf32, #tpu.memory_space<vmem>>, vector<1x32xf32>
    %159 = vector.broadcast %158 : vector<1x32xf32> to vector<64x32xf32>
    %160 = arith.mulf %159, %155 : vector<64x32xf32>
    %161 = arith.select %157, %155, %160 : vector<64x32xi1>, vector<64x32xf32>
    %162 = arith.truncf %161 : vector<64x32xf32> to vector<64x32xbf16>
    %c0_41 = arith.constant 0 : index
    %c0_42 = arith.constant 0 : index
    %163 = vector.load %arg8[%c0_41, %c0_42] : memref<32x16xbf16, #tpu.memory_space<vmem>>, vector<32x16xbf16>
    %cst_43 = arith.constant dense<0.000000e+00> : vector<64x16xf32>
    %164 = tpu.matmul %162, %163, %cst_43 {dimension_numbers = #tpu.dot_dimension_numbers<[1], [0], [0], [1], [0, 0, 1, 1], [], []>} : vector<64x32xbf16>, vector<32x16xbf16>, vector<64x16xf32> -> vector<64x16xf32>
    %c0_44 = arith.constant 0 : index
    %c0_45 = arith.constant 0 : index
    %165 = vector.load %arg9[%c0_44, %c0_45] : memref<1x16xf32, #tpu.memory_space<vmem>>, vector<1x16xf32>
    %166 = vector.broadcast %165 : vector<1x16xf32> to vector<64x16xf32>
    %167 = arith.addf %164, %166 : vector<64x16xf32>
    %168 = vector.shape_cast %167 : vector<64x16xf32> to vector<1x64x16xf32>
    %cst_46 = arith.constant dense<0.000000e+00> : vector<1x16xf32>
    %169 = vector.multi_reduction <add>, %168, %cst_46 [1] : vector<1x64x16xf32> to vector<1x16xf32>
    %170 = vector.shape_cast %169 : vector<1x16xf32> to vector<1x1x16xf32>
    %cst_47 = arith.constant 6.400000e+01 : f32
    %171 = vector.broadcast %cst_47 : f32 to vector<1x1x16xf32>
    %172 = arith.divf %170, %171 : vector<1x1x16xf32>
    %c0_48 = arith.constant 0 : index
    %c0_49 = arith.constant 0 : index
    %173 = vector.load %arg10[%c0_48, %c0_49] : memref<4x16xf32, #tpu.memory_space<vmem>>, vector<4x16xf32>
    %174 = vector.shape_cast %173 : vector<4x16xf32> to vector<1x4x16xf32>
    %175 = vector.broadcast %172 : vector<1x1x16xf32> to vector<1x4x16xf32>
    %176 = arith.mulf %174, %175 : vector<1x4x16xf32>
    %cst_50 = arith.constant dense<0.000000e+00> : vector<1x4xf32>
    %177 = vector.multi_reduction <add>, %176, %cst_50 [2] : vector<1x4x16xf32> to vector<1x4xf32>
    %178 = vector.shape_cast %177 : vector<1x4xf32> to vector<1x4x1xf32>
    %cst_51 = arith.constant 0.000000e+00 : f32
    %179 = vector.broadcast %cst_51 : f32 to vector<1x4x1xf32>
    %180 = arith.maximumf %178, %179 : vector<1x4x1xf32>
    %c0_52 = arith.constant 0 : index
    %c0_53 = arith.constant 0 : index
    %181 = vector.load %arg11[%c0_52, %c0_53] : memref<4x16xf32, #tpu.memory_space<vmem>>, vector<4x16xf32>
    %182 = vector.shape_cast %181 : vector<4x16xf32> to vector<1x4x16xf32>
    %183 = vector.broadcast %180 : vector<1x4x1xf32> to vector<1x4x16xf32>
    %184 = arith.mulf %182, %183 : vector<1x4x16xf32>
    %cst_54 = arith.constant dense<0.000000e+00> : vector<1x16xf32>
    %185 = vector.multi_reduction <add>, %184, %cst_54 [1] : vector<1x4x16xf32> to vector<1x16xf32>
    %186 = vector.shape_cast %185 : vector<1x16xf32> to vector<1x1x16xf32>
    %187 = arith.negf %186 : vector<1x1x16xf32>
    %188 = math.exp %187 : vector<1x1x16xf32>
    %cst_55 = arith.constant 1.000000e+00 : f32
    %189 = vector.broadcast %cst_55 : f32 to vector<1x1x16xf32>
    %190 = arith.addf %189, %188 : vector<1x1x16xf32>
    %191 = arith.divf %189, %190 : vector<1x1x16xf32>
    %c0_56 = arith.constant 0 : index
    %c0_57 = arith.constant 0 : index
    %c0_58 = arith.constant 0 : index
    %192 = vector.load %arg1[%c0_56, %c0_57, %c0_58] : memref<1x64x16xf32, #tpu.memory_space<vmem>>, vector<1x64x16xf32>
    %193 = vector.broadcast %191 : vector<1x1x16xf32> to vector<1x64x16xf32>
    %194 = arith.mulf %168, %193 : vector<1x64x16xf32>
    %195 = arith.addf %192, %194 : vector<1x64x16xf32>
    %c0_59 = arith.constant 0 : index
    %c0_60 = arith.constant 0 : index
    %c0_61 = arith.constant 0 : index
    %196 = vector.load %arg12[%c0_59, %c0_60, %c0_61] : memref<1x64x16xf32, #tpu.memory_space<vmem>>, vector<1x64x16xf32>
    tpu.vector_store %arg12[%c0_59, %c0_60, %c0_61], %195 {strides = array<i32>} : memref<1x64x16xf32, #tpu.memory_space<vmem>>, vector<1x64x16xf32>,
    return
  }
  func.func @transform_0(%arg0: i32) -> (i32, i32, i32) {
    %c0_i32 = arith.constant 0 : i32
    %c0_i32_0 = arith.constant 0 : i32
    %c0_i32_1 = arith.constant 0 : i32
    return %arg0, %c0_i32, %c0_i32_0 : i32, i32, i32
  }
  func.func @transform_1(%arg0: i32) -> (i32, i32) {
    %c0_i32 = arith.constant 0 : i32
    %c0_i32_0 = arith.constant 0 : i32
    %c0_i32_1 = arith.constant 0 : i32
    return %c0_i32, %c0_i32_0 : i32, i32
  }
  func.func @transform_2(%arg0: i32) -> (i32, i32) {
    %c0_i32 = arith.constant 0 : i32
    %c0_i32_0 = arith.constant 0 : i32
    %c0_i32_1 = arith.constant 0 : i32
    return %c0_i32, %c0_i32_0 : i32, i32
  }
  func.func @transform_3(%arg0: i32) -> (i32, i32) {
    %c0_i32 = arith.constant 0 : i32
    %c0_i32_0 = arith.constant 0 : i32
    %c0_i32_1 = arith.constant 0 : i32
    return %c0_i32, %c0_i32_0 : i32, i32
  }
  func.func @transform_4(%arg0: i32) -> (i32, i32) {
    %c0_i32 = arith.constant 0 : i32
    %c0_i32_0 = arith.constant 0 : i32
    %c0_i32_1 = arith.constant 0 : i32
    return %c0_i32, %c0_i32_0 : i32, i32
  }
  func.func @transform_5(%arg0: i32) -> (i32, i32) {
    %c0_i32 = arith.constant 0 : i32
    %c0_i32_0 = arith.constant 0 : i32
    %c0_i32_1 = arith.constant 0 : i32
    return %c0_i32, %c0_i32_0 : i32, i32
  }
  func.func @transform_6(%arg0: i32) -> (i32, i32) {
    %c0_i32 = arith.constant 0 : i32
    %c0_i32_0 = arith.constant 0 : i32
    %c0_i32_1 = arith.constant 0 : i32
    return %c0_i32, %c0_i32_0 : i32, i32
  }
  func.func @transform_7(%arg0: i32) -> (i32, i32) {
    %c0_i32 = arith.constant 0 : i32
    %c0_i32_0 = arith.constant 0 : i32
    %c0_i32_1 = arith.constant 0 : i32
    return %c0_i32, %c0_i32_0 : i32, i32
  }
  func.func @transform_8(%arg0: i32) -> (i32, i32) {
    %c0_i32 = arith.constant 0 : i32
    %c0_i32_0 = arith.constant 0 : i32
    %c0_i32_1 = arith.constant 0 : i32
    return %c0_i32, %c0_i32_0 : i32, i32
  }
  func.func @transform_9(%arg0: i32) -> (i32, i32) {
    %c0_i32 = arith.constant 0 : i32
    %c0_i32_0 = arith.constant 0 : i32
    %c0_i32_1 = arith.constant 0 : i32
    return %c0_i32, %c0_i32_0 : i32, i32
  }
  func.func @transform_10(%arg0: i32) -> (i32, i32) {
    %c0_i32 = arith.constant 0 : i32
    %c0_i32_0 = arith.constant 0 : i32
    %c0_i32_1 = arith.constant 0 : i32
    return %c0_i32, %c0_i32_0 : i32, i32
  }
  func.func @transform_11(%arg0: i32) -> (i32, i32, i32) {
    %c0_i32 = arith.constant 0 : i32
    %c0_i32_0 = arith.constant 0 : i32
    %c0_i32_1 = arith.constant 0 : i32
    return %arg0, %c0_i32, %c0_i32_0 : i32, i32, i32
  }
}

</mosaic_0001>

<llo_original>
// kernel: tpu_custom_call.1
$region0: #{tpu_custom_call.1}
  #allocation0 [shape = 'u32[]', space=smem, size = 0x4, offset = 0x4, fixed_abs, tag = 'smem constant byte address 0x4 - core index']
  #allocation1 [shape = 'u32[144,128]{1,0:T(1,128)}', space=vmem, size = 0x12000, scoped, tag = 'internal scratch']
  %s0 = inlined_call_operand.vmem [shape: f32[4,64,16], index: 0, kind: input, shape index: {}]
  %s1 = inlined_call_operand.vmem [shape: bf16[16,32], index: 1, kind: input, shape index: {}]
  %s2 = inlined_call_operand.vmem [shape: f32[1,32], index: 2, kind: input, shape index: {}]
  %s3 = inlined_call_operand.vmem [shape: f32[1,32], index: 3, kind: input, shape index: {}]
  %s4 = inlined_call_operand.vmem [shape: f32[9,32], index: 4, kind: input, shape index: {}]
  %s5 = inlined_call_operand.vmem [shape: f32[1,32], index: 5, kind: input, shape index: {}]
  %s6 = inlined_call_operand.vmem [shape: f32[1,32], index: 6, kind: input, shape index: {}]
  %s7 = inlined_call_operand.vmem [shape: bf16[32,16], index: 7, kind: input, shape index: {}]
  %s8 = inlined_call_operand.vmem [shape: f32[1,16], index: 8, kind: input, shape index: {}]
  %s9 = inlined_call_operand.vmem [shape: f32[4,16], index: 9, kind: input, shape index: {}]
  %s10 = inlined_call_operand.vmem [shape: f32[4,16], index: 10, kind: input, shape index: {}]
  %s11 = inlined_call_operand.vmem [shape: f32[4,64,16], index: 11, kind: output, shape index: {}]
  %s12 = sld [smem:[#allocation0]]
  $region77: #{tpu_custom_call.1} parent=0
    _
  %s14 = ssub.s32 1, %s12
  %s15 = scalar_select 0, %s14, %s12
  loop: start=0, step=1, limit=6
  $region2: #{tpu_custom_call.1} parent=0 // loop_pre_header
    _
  $region3: #{tpu_custom_call.1} parent=0 // loop_header
    %s17 = sphi 0, %s21
    %p18 = scmp.ge.s32.totalorder %s17, 6
    %s27 = sphi 0, %s29
    %s30 = sphi 0, %s27
    %s31 = sphi 0, %s30
    %s47 = sphi 0, %s31
    %s51 = sphi 0, %s51
    %s53 = sphi 0, %s51
    %s54 = sphi 0, %s53
    %s68 = sphi 0, %s54
    %s72 = sphi 0, %s72
    %s74 = sphi 0, %s72
    %s75 = sphi 0, %s74
    %s89 = sphi 0, %s75
    %s93 = sphi 0, %s93
    %s95 = sphi 0, %s93
    %s96 = sphi 0, %s95
    %s110 = sphi 0, %s96
    %s114 = sphi 0, %s114
    %s116 = sphi 0, %s114
    %s117 = sphi 0, %s116
    %s131 = sphi 0, %s117
    %s135 = sphi 0, %s135
    %s137 = sphi 0, %s135
    %s138 = sphi 0, %s137
    %s152 = sphi 0, %s138
    %s156 = sphi 0, %s156
    %s158 = sphi 0, %s156
    %s159 = sphi 0, %s158
    %s173 = sphi 0, %s159
    %s177 = sphi 0, %s177
    %s179 = sphi 0, %s177
    %s180 = sphi 0, %s179
    %s194 = sphi 0, %s180
    %s198 = sphi 0, %s198
    %s200 = sphi 0, %s198
    %s201 = sphi 0, %s200
    %s215 = sphi 0, %s201
    %s219 = sphi 0, %s219
    %s221 = sphi 0, %s219
    %s222 = sphi 0, %s221
    %s236 = sphi 0, %s222
    %s240 = sphi 0, %s240
    %s242 = sphi 0, %s240
    %s243 = sphi 0, %s242
    %s257 = sphi 0, %s243
    %s263 = sphi 0, %s265
    %s266 = sphi 0, %s263
    %s267 = sphi 0, %s266
    %s283 = sphi 0, %s267
  $region4: #{tpu_custom_call.1} parent=0 // loop_header_branch
    %20 = sbr.rel (%p18) target = $region8
  $region5: #{tpu_custom_call.1} parent=0 // loop_body
    %s22 = ssub.s32 %s17, 1
    %s23 = ssub.s32 %s17, 2
    %s24 = sadd.s32 %s17, 1
    %s25 = ssub.s32 %s17, %s24
    %p26 = scmp.eq.s32.totalorder %s25, 0
    %s28 = sadd.s32 %s27, 1
    %s29 = scalar_select %p26, %s27, %s28
    %p32 = pneg %p26
    %p33 = scmp.eq.s32.totalorder %s17, 3
    %p34 = por %p32, %p33
    %p35 = scmp.ne.s32.totalorder %s27, %s30
    %p36 = scmp.eq.s32.totalorder %s17, 0
    %p37 = por %p35, %p36
    %p38 = scmp.ne.s32.totalorder %s27, %s30
    %p39 = scmp.eq.s32.totalorder %s22, 3
    %p40 = por %p38, %p39
    %p41 = scmp.ne.s32.totalorder %s30, %s31
    %p42 = scmp.eq.s32.totalorder %s22, 0
    %p43 = por %p41, %p42
    %p44 = scmp.ne.s32.totalorder %s30, %s31
    %p45 = scmp.eq.s32.totalorder %s23, 3
    %p46 = por %p44, %p45
    %p48 = scmp.ne.s32.totalorder %s31, %s47
    %p49 = scmp.eq.s32.totalorder %s23, 0
    %p50 = por %p48, %p49
    %s52 = sadd.s32 %s51, 1
    %p55 = scmp.eq.s32.totalorder %s17, 3
    %p56 = scmp.ne.s32.totalorder %s51, %s53
    %p57 = scmp.eq.s32.totalorder %s17, 0
    %p58 = por %p56, %p57
    %p59 = scmp.ne.s32.totalorder %s51, %s53
    %p60 = scmp.eq.s32.totalorder %s22, 3
    %p61 = por %p59, %p60
    %p62 = scmp.ne.s32.totalorder %s53, %s54
    %p63 = scmp.eq.s32.totalorder %s22, 0
    %p64 = por %p62, %p63
    %p65 = scmp.ne.s32.totalorder %s53, %s54
    %p66 = scmp.eq.s32.totalorder %s23, 3
    %p67 = por %p65, %p66
    %p69 = scmp.ne.s32.totalorder %s54, %s68
    %p70 = scmp.eq.s32.totalorder %s23, 0
    %p71 = por %p69, %p70
    %s73 = sadd.s32 %s72, 1
    %p76 = scmp.eq.s32.totalorder %s17, 3
    %p77 = scmp.ne.s32.totalorder %s72, %s74
    %p78 = scmp.eq.s32.totalorder %s17, 0
    %p79 = por %p77, %p78
    %p80 = scmp.ne.s32.totalorder %s72, %s74
    %p81 = scmp.eq.s32.totalorder %s22, 3
    %p82 = por %p80, %p81
    %p83 = scmp.ne.s32.totalorder %s74, %s75
    %p84 = scmp.eq.s32.totalorder %s22, 0
    %p85 = por %p83, %p84
    %p86 = scmp.ne.s32.totalorder %s74, %s75
    %p87 = scmp.eq.s32.totalorder %s23, 3
    %p88 = por %p86, %p87
    %p90 = scmp.ne.s32.totalorder %s75, %s89
    %p91 = scmp.eq.s32.totalorder %s23, 0
    %p92 = por %p90, %p91
    %s94 = sadd.s32 %s93, 1
    %p97 = scmp.eq.s32.totalorder %s17, 3
    %p98 = scmp.ne.s32.totalorder %s93, %s95
    %p99 = scmp.eq.s32.totalorder %s17, 0
    %p100 = por %p98, %p99
    %p101 = scmp.ne.s32.totalorder %s93, %s95
    %p102 = scmp.eq.s32.totalorder %s22, 3
    %p103 = por %p101, %p102
    %p104 = scmp.ne.s32.totalorder %s95, %s96
    %p105 = scmp.eq.s32.totalorder %s22, 0
    %p106 = por %p104, %p105
    %p107 = scmp.ne.s32.totalorder %s95, %s96
    %p108 = scmp.eq.s32.totalorder %s23, 3
    %p109 = por %p107, %p108
    %p111 = scmp.ne.s32.totalorder %s96, %s110
    %p112 = scmp.eq.s32.totalorder %s23, 0
    %p113 = por %p111, %p112
    %s115 = sadd.s32 %s114, 1
    %p118 = scmp.eq.s32.totalorder %s17, 3
    %p119 = scmp.ne.s32.totalorder %s114, %s116
    %p120 = scmp.eq.s32.totalorder %s17, 0
    %p121 = por %p119, %p120
    %p122 = scmp.ne.s32.totalorder %s114, %s116
    %p123 = scmp.eq.s32.totalorder %s22, 3
    %p124 = por %p122, %p123
    %p125 = scmp.ne.s32.totalorder %s116, %s117
    %p126 = scmp.eq.s32.totalorder %s22, 0
    %p127 = por %p125, %p126
    %p128 = scmp.ne.s32.totalorder %s116, %s117
    %p129 = scmp.eq.s32.totalorder %s23, 3
    %p130 = por %p128, %p129
    %p132 = scmp.ne.s32.totalorder %s117, %s131
    %p133 = scmp.eq.s32.totalorder %s23, 0
    %p134 = por %p132, %p133
    %s136 = sadd.s32 %s135, 1
    %p139 = scmp.eq.s32.totalorder %s17, 3
    %p140 = scmp.ne.s32.totalorder %s135, %s137
    %p141 = scmp.eq.s32.totalorder %s17, 0
    %p142 = por %p140, %p141
    %p143 = scmp.ne.s32.totalorder %s135, %s137
    %p144 = scmp.eq.s32.totalorder %s22, 3
    %p145 = por %p143, %p144
    %p146 = scmp.ne.s32.totalorder %s137, %s138
    %p147 = scmp.eq.s32.totalorder %s22, 0
    %p148 = por %p146, %p147
    %p149 = scmp.ne.s32.totalorder %s137, %s138
    %p150 = scmp.eq.s32.totalorder %s23, 3
    %p151 = por %p149, %p150
    %p153 = scmp.ne.s32.totalorder %s138, %s152
    %p154 = scmp.eq.s32.totalorder %s23, 0
    %p155 = por %p153, %p154
    %s157 = sadd.s32 %s156, 1
    %p160 = scmp.eq.s32.totalorder %s17, 3
    %p161 = scmp.ne.s32.totalorder %s156, %s158
    %p162 = scmp.eq.s32.totalorder %s17, 0
    %p163 = por %p161, %p162
    %p164 = scmp.ne.s32.totalorder %s156, %s158
    %p165 = scmp.eq.s32.totalorder %s22, 3
    %p166 = por %p164, %p165
    %p167 = scmp.ne.s32.totalorder %s158, %s159
    %p168 = scmp.eq.s32.totalorder %s22, 0
    %p169 = por %p167, %p168
    %p170 = scmp.ne.s32.totalorder %s158, %s159
    %p171 = scmp.eq.s32.totalorder %s23, 3
    %p172 = por %p170, %p171
    %p174 = scmp.ne.s32.totalorder %s159, %s173
    %p175 = scmp.eq.s32.totalorder %s23, 0
    %p176 = por %p174, %p175
    %s178 = sadd.s32 %s177, 1
    %p181 = scmp.eq.s32.totalorder %s17, 3
    %p182 = scmp.ne.s32.totalorder %s177, %s179
    %p183 = scmp.eq.s32.totalorder %s17, 0
    %p184 = por %p182, %p183
    %p185 = scmp.ne.s32.totalorder %s177, %s179
    %p186 = scmp.eq.s32.totalorder %s22, 3
    %p187 = por %p185, %p186
    %p188 = scmp.ne.s32.totalorder %s179, %s180
    %p189 = scmp.eq.s32.totalorder %s22, 0
    %p190 = por %p188, %p189
    %p191 = scmp.ne.s32.totalorder %s179, %s180
    %p192 = scmp.eq.s32.totalorder %s23, 3
    %p193 = por %p191, %p192
    %p195 = scmp.ne.s32.totalorder %s180, %s194
    %p196 = scmp.eq.s32.totalorder %s23, 0
    %p197 = por %p195, %p196
    %s199 = sadd.s32 %s198, 1
    %p202 = scmp.eq.s32.totalorder %s17, 3
    %p203 = scmp.ne.s32.totalorder %s198, %s200
    %p204 = scmp.eq.s32.totalorder %s17, 0
    %p205 = por %p203, %p204
    %p206 = scmp.ne.s32.totalorder %s198, %s200
    %p207 = scmp.eq.s32.totalorder %s22, 3
    %p208 = por %p206, %p207
    %p209 = scmp.ne.s32.totalorder %s200, %s201
    %p210 = scmp.eq.s32.totalorder %s22, 0
    %p211 = por %p209, %p210
    %p212 = scmp.ne.s32.totalorder %s200, %s201
    %p213 = scmp.eq.s32.totalorder %s23, 3
    %p214 = por %p212, %p213
    %p216 = scmp.ne.s32.totalorder %s201, %s215
    %p217 = scmp.eq.s32.totalorder %s23, 0
    %p218 = por %p216, %p217
    %s220 = sadd.s32 %s219, 1
    %p223 = scmp.eq.s32.totalorder %s17, 3
    %p224 = scmp.ne.s32.totalorder %s219, %s221
    %p225 = scmp.eq.s32.totalorder %s17, 0
    %p226 = por %p224, %p225
    %p227 = scmp.ne.s32.totalorder %s219, %s221
    %p228 = scmp.eq.s32.totalorder %s22, 3
    %p229 = por %p227, %p228
    %p230 = scmp.ne.s32.totalorder %s221, %s222
    %p231 = scmp.eq.s32.totalorder %s22, 0
    %p232 = por %p230, %p231
    %p233 = scmp.ne.s32.totalorder %s221, %s222
    %p234 = scmp.eq.s32.totalorder %s23, 3
    %p235 = por %p233, %p234
    %p237 = scmp.ne.s32.totalorder %s222, %s236
    %p238 = scmp.eq.s32.totalorder %s23, 0
    %p239 = por %p237, %p238
    %s241 = sadd.s32 %s240, 1
    %p244 = scmp.eq.s32.totalorder %s17, 3
    %p245 = scmp.ne.s32.totalorder %s240, %s242
    %p246 = scmp.eq.s32.totalorder %s17, 0
    %p247 = por %p245, %p246
    %p248 = scmp.ne.s32.totalorder %s240, %s242
    %p249 = scmp.eq.s32.totalorder %s22, 3
    %p250 = por %p248, %p249
    %p251 = scmp.ne.s32.totalorder %s242, %s243
    %p252 = scmp.eq.s32.totalorder %s22, 0
    %p253 = por %p251, %p252
    %p254 = scmp.ne.s32.totalorder %s242, %s243
    %p255 = scmp.eq.s32.totalorder %s23, 3
    %p256 = por %p254, %p255
    %p258 = scmp.ne.s32.totalorder %s243, %s257
    %p259 = scmp.eq.s32.totalorder %s23, 0
    %p260 = por %p258, %p259
    %s261 = ssub.s32 %s17, %s24
    %p262 = scmp.eq.s32.totalorder %s261, 0
    %s264 = sadd.s32 %s263, 1
    %s265 = scalar_select %p262, %s263, %s264
    %p268 = pneg %p262
    %p269 = scmp.eq.s32.totalorder %s17, 3
    %p270 = por %p268, %p269
    %p271 = scmp.ne.s32.totalorder %s263, %s266
    %p272 = scmp.eq.s32.totalorder %s17, 0
    %p273 = por %p271, %p272
    %p274 = scmp.ne.s32.totalorder %s263, %s266
    %p275 = scmp.eq.s32.totalorder %s22, 3
    %p276 = por %p274, %p275
    %p277 = scmp.ne.s32.totalorder %s266, %s267
    %p278 = scmp.eq.s32.totalorder %s22, 0
    %p279 = por %p277, %p278
    %p280 = scmp.ne.s32.totalorder %s266, %s267
    %p281 = scmp.eq.s32.totalorder %s23, 3
    %p282 = por %p280, %p281
    %p284 = scmp.ne.s32.totalorder %s267, %s283
    %p285 = scmp.eq.s32.totalorder %s23, 0
    %p286 = por %p284, %p285
    %p287 = scmp.le.s32.totalorder 1, %s17
    %p288 = scmp.lt.s32.totalorder %s17, 5
    %p289 = pnand %p287, %p288
    %p290 = pneg %p289
    // Predicated region
    $region9: #{tpu_custom_call.1} parent=5 // pred_check
      _
    $region10: #{tpu_custom_call.1} parent=5 // pred_check_branch
      %292 = sbr.rel (%p289) target = $region12
    $region11: #{tpu_custom_call.1} parent=5 // pred_region
      %s293 = ssub.s32 %s17, 1
      // Predicated region
      $region13: #{tpu_custom_call.1} parent=11 // pred_check
        %p294 = pneg %p64
      $region14: #{tpu_custom_call.1} parent=11 // pred_check_branch
        %296 = sbr.rel (%p294) target = $region16
      $region15: #{tpu_custom_call.1} parent=11 // pred_region
        _
      $region16: #{tpu_custom_call.1} parent=11 // pred_fallthru
        _
      // Predicated region
      $region17: #{tpu_custom_call.1} parent=11 // pred_check
        %p297 = pneg %p85
      $region18: #{tpu_custom_call.1} parent=11 // pred_check_branch
        %299 = sbr.rel (%p297) target = $region20
      $region19: #{tpu_custom_call.1} parent=11 // pred_region
        _
      $region20: #{tpu_custom_call.1} parent=11 // pred_fallthru
        _
      // Predicated region
      $region21: #{tpu_custom_call.1} parent=11 // pred_check
        %p300 = pneg %p106
      $region22: #{tpu_custom_call.1} parent=11 // pred_check_branch
        %302 = sbr.rel (%p300) target = $region24
      $region23: #{tpu_custom_call.1} parent=11 // pred_region
        _
      $region24: #{tpu_custom_call.1} parent=11 // pred_fallthru
        _
      // Predicated region
      $region25: #{tpu_custom_call.1} parent=11 // pred_check
        %p303 = pneg %p127
      $region26: #{tpu_custom_call.1} parent=11 // pred_check_branch
        %305 = sbr.rel (%p303) target = $region28
      $region27: #{tpu_custom_call.1} parent=11 // pred_region
        _
      $region28: #{tpu_custom_call.1} parent=11 // pred_fallthru
        _
      // Predicated region
      $region29: #{tpu_custom_call.1} parent=11 // pred_check
        %p306 = pneg %p148
      $region30: #{tpu_custom_call.1} parent=11 // pred_check_branch
        %308 = sbr.rel (%p306) target = $region32
      $region31: #{tpu_custom_call.1} parent=11 // pred_region
        _
      $region32: #{tpu_custom_call.1} parent=11 // pred_fallthru
        _
      // Predicated region
      $region33: #{tpu_custom_call.1} parent=11 // pred_check
        %p309 = pneg %p169
      $region34: #{tpu_custom_call.1} parent=11 // pred_check_branch
        %311 = sbr.rel (%p309) target = $region36
      $region35: #{tpu_custom_call.1} parent=11 // pred_region
        _
      $region36: #{tpu_custom_call.1} parent=11 // pred_fallthru
        _
      // Predicated region
      $region37: #{tpu_custom_call.1} parent=11 // pred_check
        %p312 = pneg %p190
      $region38: #{tpu_custom_call.1} parent=11 // pred_check_branch
        %314 = sbr.rel (%p312) target = $region40
      $region39: #{tpu_custom_call.1} parent=11 // pred_region
        _
      $region40: #{tpu_custom_call.1} parent=11 // pred_fallthru
        _
      // Predicated region
      $region41: #{tpu_custom_call.1} parent=11 // pred_check
        %p315 = pneg %p211
      $region42: #{tpu_custom_call.1} parent=11 // pred_check_branch
        %317 = sbr.rel (%p315) target = $region44
      $region43: #{tpu_custom_call.1} parent=11 // pred_region
        _
      $region44: #{tpu_custom_call.1} parent=11 // pred_fallthru
        _
      // Predicated region
      $region45: #{tpu_custom_call.1} parent=11 // pred_check
        %p318 = pneg %p232
      $region46: #{tpu_custom_call.1} parent=11 // pred_check_branch
        %320 = sbr.rel (%p318) target = $region48
      $region47: #{tpu_custom_call.1} parent=11 // pred_region
        _
      $region48: #{tpu_custom_call.1} parent=11 // pred_fallthru
        _
      // Predicated region
      $region49: #{tpu_custom_call.1} parent=11 // pred_check
        %p321 = pneg %p253
      $region50: #{tpu_custom_call.1} parent=11 // pred_check_branch
        %323 = sbr.rel (%p321) target = $region52
      $region51: #{tpu_custom_call.1} parent=11 // pred_region
        _
      $region52: #{tpu_custom_call.1} parent=11 // pred_fallthru
        _
    $region12: #{tpu_custom_call.1} parent=5 // pred_fallthru
      _
    %p324 = scmp.lt.s32.totalorder %s17, 4
    // Predicated region
    $region53: #{tpu_custom_call.1} parent=5 // pred_check
      %p325 = pneg %p324
    $region54: #{tpu_custom_call.1} parent=5 // pred_check_branch
      %327 = sbr.rel (%p325) target = $region56
    $region55: #{tpu_custom_call.1} parent=5 // pred_region
      // Predicated region
      $region57: #{tpu_custom_call.1} parent=55 // pred_check
        %p328 = pneg %p37
      $region58: #{tpu_custom_call.1} parent=55 // pred_check_branch
        %330 = sbr.rel (%p328) target = $region60
      $region59: #{tpu_custom_call.1} parent=55 // pred_region
        %p331 = scmp.lt.s32.totalorder %s17, 3
        %s332 = scalar_select %p331, %s17, 3
        %s333 = smul.addr %s332, 8
        %s334 = smul.addr %s333, 8
        %s335 = scalar_lea.vmem %s0, %s334
      $region60: #{tpu_custom_call.1} parent=55 // pred_fallthru
        _
    $region56: #{tpu_custom_call.1} parent=5 // pred_fallthru
      _
    %p336 = scmp.le.s32.totalorder 1, %s17
    %p337 = scmp.lt.s32.totalorder %s17, 5
    %p338 = pnand %p336, %p337
    %p339 = pneg %p338
    // Predicated region
    $region61: #{tpu_custom_call.1} parent=5 // pred_check
      _
    $region62: #{tpu_custom_call.1} parent=5 // pred_check_branch
      %341 = sbr.rel (%p338) target = $region64
    $region63: #{tpu_custom_call.1} parent=5 // pred_region
      %s342 = ssub.s32 %s17, 1
      %p343 = scmp.lt.s32.totalorder %s22, 3
      %s344 = scalar_select %p343, %s22, 3
      %s345 = smul.addr %s344, 8
      %s346 = smul.addr %s345, 8
      %s347 = scalar_lea.vmem %s0, %s346
      %p348 = pneg %p43
      %p349 = pneg %p40
      %p350 = pneg %p64
      %p351 = pneg %p61
      %p352 = pneg %p85
      %p353 = pneg %p82
      %p354 = pneg %p106
      %p355 = pneg %p103
      %p356 = pneg %p127
      %p357 = pneg %p124
      %p358 = pneg %p148
      %p359 = pneg %p145
      %p360 = pneg %p169
      %p361 = pneg %p166
      %p362 = pneg %p190
      %p363 = pneg %p187
      %p364 = pneg %p211
      %p365 = pneg %p208
      %p366 = pneg %p232
      %p367 = pneg %p229
      %p368 = pneg %p253
      %p369 = pneg %p250
      %p370 = pneg %p279
      %p371 = pneg %p276
      %p372 = scmp.lt.s32.totalorder %s22, 3
      %s373 = scalar_select %p372, %s22, 3
      %s374 = smul.addr %s373, 8
      %s375 = smul.addr %s374, 8
      %s376 = scalar_lea.vmem %s11, %s375
      %p377 = scmp.lt.s32.totalorder %s22, 3
      %s378 = scalar_select %p377, %s22, 3
      %s379 = smul.addr %s378, 8
      %s380 = smul.addr %s379, 8
      %s381 = scalar_lea.vmem %s0, %s380
      %p382 = scmp.lt.s32.totalorder %s22, 3
      %s383 = scalar_select %p382, %s22, 3
      %s384 = smul.addr %s383, 8
      %s385 = smul.addr %s384, 8
      %s386 = scalar_lea.vmem %s11, %s385
      %v388 = vld [vmem:[%s381] sm:$0xff]
      %v389 = vld [vmem:[%s381 + $0x8] sm:$0xff]
      %v390 = vld [vmem:[%s381 + $0x10] sm:$0xff]
      %v391 = vld [vmem:[%s381 + $0x18] sm:$0xff]
      %v392 = vld [vmem:[%s381 + $0x20] sm:$0xff]
      %v393 = vld [vmem:[%s381 + $0x28] sm:$0xff]
      %v394 = vld [vmem:[%s381 + $0x30] sm:$0xff]
      %v395 = vld [vmem:[%s381 + $0x38] sm:$0xff]
      %v396 = vpack.c.bf16 %v389, %v388
      %v397 = vpack.c.bf16 %v391, %v390
      %v398 = vpack.c.bf16 %v393, %v392
      %v399 = vpack.c.bf16 %v395, %v394
      %v400 = vld [vmem:[%s1] sm:$0xf]
      %v401 = vld [vmem:[%s1 + $0x4] sm:$0xf]
      %v402 = vld [vmem:[%s2] sm:$0x1]
      %v404 = vlaneseq
      %v405 = vshrl.u32 %v404, 7
      %v406 = vsub.s32 0, %v405
      %v407 = vrot.slane %v402, %v406
      %v411 = vunpack.c.l.b16 %v400
      %v412 = vunpack.c.l.b16 %v401
      %v413 = vpack.c.b16 %v412, %v411
      %vm415 = vcmask 130048
      %v417 = vsel %vm415, %v396, 0
      %v420 = vsel %vm415, %v397, 0
      %v423 = vsel %vm415, %v398, 0
      %v426 = vsel %vm415, %v399, 0
      %428 = vmatprep.subr.bf16.mxu0 0
      %429 = vmatpush1.bf16.msra.mxu0 %v413
      %430 = vmatprep.subr.bf16.mxu0 0
      %431 = vmatpush1.bf16.msra.mxu0 0
      %432 = vmatprep.subr.bf16.mxu0 0
      %433 = vmatpush1.bf16.msra.mxu0 0
      %434 = vmatprep.subr.bf16.mxu0 0
      %435 = vmatpush1.bf16.msra.mxu0 0
      %436 = vmatprep.subr.bf16.mxu0 0
      %437 = vmatpush1.bf16.msra.mxu0 0
      %438 = vmatprep.subr.bf16.mxu0 0
      %439 = vmatpush1.bf16.msra.mxu0 0
      %440 = vmatprep.subr.bf16.mxu0 0
      %441 = vmatpush1.bf16.msra.mxu0 0
      %442 = vmatprep.subr.bf16.mxu0 0
      %443 = vmatpush1.bf16.msra.mxu0 0
      %444 = vmatprep.subr.bf16.mxu0 0
      %445 = vmatpush1.bf16.msra.mxu0 0
      %446 = vmatprep.subr.bf16.mxu0 0
      %447 = vmatpush1.bf16.msra.mxu0 0
      %448 = vmatprep.subr.bf16.mxu0 0
      %449 = vmatpush1.bf16.msra.mxu0 0
      %450 = vmatprep.subr.bf16.mxu0 0
      %451 = vmatpush1.bf16.msra.mxu0 0
      %452 = vmatprep.subr.bf16.mxu0 0
      %453 = vmatpush1.bf16.msra.mxu0 0
      %454 = vmatprep.subr.bf16.mxu0 0
      %455 = vmatpush1.bf16.msra.mxu0 0
      %456 = vmatprep.subr.bf16.mxu0 0
      %457 = vmatpush1.bf16.msra.mxu0 0
      %458 = vmatprep.subr.bf16.mxu0 0
      %459 = vmatpush1.bf16.msra.mxu0 0
      %460 = vmatprep.mubr.bf16.mxu0 0
      %461 = vmatmul.mubr.bf16.gmra.mrb[0].mxu0 %v417
      %v462 = vpop.f32.mrb[0].mxu0
      %v463 = vadd.f32 %v407, %v462
      %v464 = vpop.f32.mrb[0].mxu0
      %v465 = vpop.f32.mrb[0].mxu0
      %v466 = vadd.f32 %v407, %v465
      %v467 = vpop.f32.mrb[0].mxu0
      %468 = vmatprep.mubr.bf16.mxu0 0
      %469 = vmatmul.mubr.bf16.gmra.mrb[0].mxu0 %v420
      %v470 = vpop.f32.mrb[0].mxu0
      %v471 = vadd.f32 %v407, %v470
      %v472 = vpop.f32.mrb[0].mxu0
      %v473 = vpop.f32.mrb[0].mxu0
      %v474 = vadd.f32 %v407, %v473
      %v475 = vpop.f32.mrb[0].mxu0
      %476 = vmatprep.mubr.bf16.mxu0 0
      %477 = vmatmul.mubr.bf16.gmra.mrb[0].mxu0 %v423
      %v478 = vpop.f32.mrb[0].mxu0
      %v479 = vadd.f32 %v407, %v478
      %v480 = vpop.f32.mrb[0].mxu0
      %v481 = vpop.f32.mrb[0].mxu0
      %v482 = vadd.f32 %v407, %v481
      %v483 = vpop.f32.mrb[0].mxu0
      %484 = vmatprep.mubr.bf16.mxu0 0
      %485 = vmatmul.mubr.bf16.gmra.mrb[0].mxu0 %v426
      %v486 = vpop.f32.mrb[0].mxu0
      %v487 = vadd.f32 %v407, %v486
      %v488 = vpop.f32.mrb[0].mxu0
      %v489 = vpop.f32.mrb[0].mxu0
      %v490 = vadd.f32 %v407, %v489
      %v491 = vpop.f32.mrb[0].mxu0
      %492 = vdwg.mxu0
      %vm493 = vcmp.ge.f32.partialorder %v463, 0.0
      %vm494 = vcmp.ge.f32.partialorder %v466, 0.0
      %vm495 = vcmp.ge.f32.partialorder %v471, 0.0
      %vm496 = vcmp.ge.f32.partialorder %v474, 0.0
      %vm497 = vcmp.ge.f32.partialorder %v479, 0.0
      %vm498 = vcmp.ge.f32.partialorder %v482, 0.0
      %vm499 = vcmp.ge.f32.partialorder %v487, 0.0
      %vm500 = vcmp.ge.f32.partialorder %v490, 0.0
      %v501 = vld [vmem:[%s3] sm:$0x1]
      %v503 = vlaneseq
      %v504 = vshrl.u32 %v503, 7
      %v505 = vsub.s32 0, %v504
      %v506 = vrot.slane %v501, %v505
      %v508 = vmul.f32 %v506, %v463
      %v509 = vmul.f32 %v506, %v466
      %v510 = vmul.f32 %v506, %v471
      %v511 = vmul.f32 %v506, %v474
      %v512 = vmul.f32 %v506, %v479
      %v513 = vmul.f32 %v506, %v482
      %v514 = vmul.f32 %v506, %v487
      %v515 = vmul.f32 %v506, %v490
      %v516 = vsel %vm493, %v463, %v508
      %v517 = vsel %vm494, %v466, %v509
      %v518 = vsel %vm495, %v471, %v510
      %v519 = vsel %vm496, %v474, %v511
      %v520 = vsel %vm497, %v479, %v512
      %v521 = vsel %vm498, %v482, %v513
      %v522 = vsel %vm499, %v487, %v514
      %v523 = vsel %vm500, %v490, %v515
      %v524 = vrot.slane %v516, 7
      %v525 = vrot.slane %v517, 7
      %v526 = vrot.slane %v518, 7
      %v527 = vrot.slane %v519, 7
      %v528 = vrot.slane %v520, 7
      %v529 = vrot.slane %v521, 7
      %v530 = vrot.slane %v522, 7
      %v531 = vrot.slane %v523, 7
      %v532 = vlaneseq
      %v533 = vshrl.u32 %v532, 7
      %vm534 = vcmp.lt.s32.totalorder %v533, 1
      %v535 = vsel %vm534, %v530, %v531
      %v536 = vsel %vm534, %v529, %v530
      %v537 = vsel %vm534, %v528, %v529
      %v538 = vsel %vm534, %v527, %v528
      %v539 = vsel %vm534, %v526, %v527
      %v540 = vsel %vm534, %v525, %v526
      %v541 = vsel %vm534, %v524, %v525
      %v542 = vsel %vm534, %v531, %v524
      %v543 = vrot.slane %v516, 1
      %v544 = vrot.slane %v517, 1
      %v545 = vrot.slane %v518, 1
      %v546 = vrot.slane %v519, 1
      %v547 = vrot.slane %v520, 1
      %v548 = vrot.slane %v521, 1
      %v549 = vrot.slane %v522, 1
      %v550 = vrot.slane %v523, 1
      %vm551 = vcmp.lt.s32.totalorder %v533, 7
      %v552 = vsel %vm551, %v549, %v550
      %v553 = vsel %vm551, %v548, %v549
      %v554 = vsel %vm551, %v547, %v548
      %v555 = vsel %vm551, %v546, %v547
      %v556 = vsel %vm551, %v545, %v546
      %v557 = vsel %vm551, %v544, %v545
      %v558 = vsel %vm551, %v543, %v544
      %v559 = vsel %vm551, %v550, %v543
      %v560 = vadd.s32 %v533, 8
      %v561 = vadd.s32 %v533, 16
      %v562 = vadd.s32 %v533, 24
      %v563 = vadd.s32 %v533, 32
      %v564 = vadd.s32 %v533, 40
      %v565 = vadd.s32 %v533, 48
      %v566 = vadd.s32 %v533, 56
      %vm567 = vcmp.lt.s32.totalorder %v533, 0
      %v568 = vsub.s32 0, %v533
      %v569 = vsel %vm567, %v568, %v533
      %v570 = vshrl.u32 %v569, 6
      %v571 = vand.u32 %v569, 63
      %v572 = vsub.s32 0, %v571
      %v573 = vsel %vm567, %v572, %v571
      %vm574 = vcmp.lt.s32.totalorder %v560, 0
      %v575 = vsub.s32 0, %v560
      %v576 = vsel %vm574, %v575, %v560
      %v577 = vshrl.u32 %v576, 6
      %v578 = vand.u32 %v576, 63
      %v579 = vsub.s32 0, %v578
      %v580 = vsel %vm574, %v579, %v578
      %vm581 = vcmp.lt.s32.totalorder %v561, 0
      %v582 = vsub.s32 0, %v561
      %v583 = vsel %vm581, %v582, %v561
      %v584 = vshrl.u32 %v583, 6
      %v585 = vand.u32 %v583, 63
      %v586 = vsub.s32 0, %v585
      %v587 = vsel %vm581, %v586, %v585
      %vm588 = vcmp.lt.s32.totalorder %v562, 0
      %v589 = vsub.s32 0, %v562
      %v590 = vsel %vm588, %v589, %v562
      %v591 = vshrl.u32 %v590, 6
      %v592 = vand.u32 %v590, 63
      %v593 = vsub.s32 0, %v592
      %v594 = vsel %vm588, %v593, %v592
      %vm595 = vcmp.lt.s32.totalorder %v563, 0
      %v596 = vsub.s32 0, %v563
      %v597 = vsel %vm595, %v596, %v563
      %v598 = vshrl.u32 %v597, 6
      %v599 = vand.u32 %v597, 63
      %v600 = vsub.s32 0, %v599
      %v601 = vsel %vm595, %v600, %v599
      %vm602 = vcmp.lt.s32.totalorder %v564, 0
      %v603 = vsub.s32 0, %v564
      %v604 = vsel %vm602, %v603, %v564
      %v605 = vshrl.u32 %v604, 6
      %v606 = vand.u32 %v604, 63
      %v607 = vsub.s32 0, %v606
      %v608 = vsel %vm602, %v607, %v606
      %vm609 = vcmp.lt.s32.totalorder %v565, 0
      %v610 = vsub.s32 0, %v565
      %v611 = vsel %vm609, %v610, %v565
      %v612 = vshrl.u32 %v611, 6
      %v613 = vand.u32 %v611, 63
      %v614 = vsub.s32 0, %v613
      %v615 = vsel %vm609, %v614, %v613
      %vm616 = vcmp.lt.s32.totalorder %v566, 0
      %v617 = vsub.s32 0, %v566
      %v618 = vsel %vm616, %v617, %v566
      %v619 = vshrl.u32 %v618, 6
      %v620 = vand.u32 %v618, 63
      %v621 = vsub.s32 0, %v620
      %v622 = vsel %vm616, %v621, %v620
      %vm623 = vcmp.ne.s32.totalorder %v573, 0
      %vm624 = vcmp.ne.s32.totalorder %v580, 0
      %vm625 = vcmp.ne.s32.totalorder %v587, 0
      %vm626 = vcmp.ne.s32.totalorder %v594, 0
      %vm627 = vcmp.ne.s32.totalorder %v601, 0
      %vm628 = vcmp.ne.s32.totalorder %v608, 0
      %vm629 = vcmp.ne.s32.totalorder %v615, 0
      %vm630 = vcmp.ne.s32.totalorder %v622, 0
      %vm631 = vcmp.lt.s32.totalorder %v573, 0
      %vm632 = vcmp.lt.s32.totalorder %v580, 0
      %vm633 = vcmp.lt.s32.totalorder %v587, 0
      %vm634 = vcmp.lt.s32.totalorder %v594, 0
      %vm635 = vcmp.lt.s32.totalorder %v601, 0
      %vm636 = vcmp.lt.s32.totalorder %v608, 0
      %vm637 = vcmp.lt.s32.totalorder %v615, 0
      %vm638 = vcmp.lt.s32.totalorder %v622, 0
      %vm639 = vmand %vm631, %vm623
      %vm640 = vmand %vm632, %vm624
      %vm641 = vmand %vm633, %vm625
      %vm642 = vmand %vm634, %vm626
      %vm643 = vmand %vm635, %vm627
      %vm644 = vmand %vm636, %vm628
      %vm645 = vmand %vm637, %vm629
      %vm646 = vmand %vm638, %vm630
      %v647 = vadd.s32 %v573, 64
      %v648 = vadd.s32 %v580, 64
      %v649 = vadd.s32 %v587, 64
      %v650 = vadd.s32 %v594, 64
      %v651 = vadd.s32 %v601, 64
      %v652 = vadd.s32 %v608, 64
      %v653 = vadd.s32 %v615, 64
      %v654 = vadd.s32 %v622, 64
      %v655 = vsel %vm639, %v647, %v573
      %v656 = vsel %vm640, %v648, %v580
      %v657 = vsel %vm641, %v649, %v587
      %v658 = vsel %vm642, %v650, %v594
      %v659 = vsel %vm643, %v651, %v601
      %v660 = vsel %vm644, %v652, %v608
      %v661 = vsel %vm645, %v653, %v615
      %v662 = vsel %vm646, %v654, %v622
      %vm663 = vcmp.lt.s32.totalorder %v533, 0
      %v664 = vsub.s32 0, %v533
      %v665 = vsel %vm663, %v664, %v533
      %v666 = vshrl.u32 %v665, 3
      %v667 = vand.u32 %v665, 7
      %v668 = vsub.s32 0, %v667
      %v669 = vsel %vm663, %v668, %v667
      %vm670 = vcmp.lt.s32.totalorder %v560, 0
      %v671 = vsub.s32 0, %v560
      %v672 = vsel %vm670, %v671, %v560
      %v673 = vshrl.u32 %v672, 3
      %v674 = vand.u32 %v672, 7
      %v675 = vsub.s32 0, %v674
      %v676 = vsel %vm670, %v675, %v674
      %vm677 = vcmp.lt.s32.totalorder %v561, 0
      %v678 = vsub.s32 0, %v561
      %v679 = vsel %vm677, %v678, %v561
      %v680 = vshrl.u32 %v679, 3
      %v681 = vand.u32 %v679, 7
      %v682 = vsub.s32 0, %v681
      %v683 = vsel %vm677, %v682, %v681
      %vm684 = vcmp.lt.s32.totalorder %v562, 0
      %v685 = vsub.s32 0, %v562
      %v686 = vsel %vm684, %v685, %v562
      %v687 = vshrl.u32 %v686, 3
      %v688 = vand.u32 %v686, 7
      %v689 = vsub.s32 0, %v688
      %v690 = vsel %vm684, %v689, %v688
      %vm691 = vcmp.lt.s32.totalorder %v563, 0
      %v692 = vsub.s32 0, %v563
      %v693 = vsel %vm691, %v692, %v563
      %v694 = vshrl.u32 %v693, 3
      %v695 = vand.u32 %v693, 7
      %v696 = vsub.s32 0, %v695
      %v697 = vsel %vm691, %v696, %v695
      %vm698 = vcmp.lt.s32.totalorder %v564, 0
      %v699 = vsub.s32 0, %v564
      %v700 = vsel %vm698, %v699, %v564
      %v701 = vshrl.u32 %v700, 3
      %v702 = vand.u32 %v700, 7
      %v703 = vsub.s32 0, %v702
      %v704 = vsel %vm698, %v703, %v702
      %vm705 = vcmp.lt.s32.totalorder %v565, 0
      %v706 = vsub.s32 0, %v565
      %v707 = vsel %vm705, %v706, %v565
      %v708 = vshrl.u32 %v707, 3
      %v709 = vand.u32 %v707, 7
      %v710 = vsub.s32 0, %v709
      %v711 = vsel %vm705, %v710, %v709
      %vm712 = vcmp.lt.s32.totalorder %v566, 0
      %v713 = vsub.s32 0, %v566
      %v714 = vsel %vm712, %v713, %v566
      %v715 = vshrl.u32 %v714, 3
      %v716 = vand.u32 %v714, 7
      %v717 = vsub.s32 0, %v716
      %v718 = vsel %vm712, %v717, %v716
      %vm719 = vcmp.ne.s32.totalorder %v669, 0
      %vm720 = vcmp.ne.s32.totalorder %v676, 0
      %vm721 = vcmp.ne.s32.totalorder %v683, 0
      %vm722 = vcmp.ne.s32.totalorder %v690, 0
      %vm723 = vcmp.ne.s32.totalorder %v697, 0
      %vm724 = vcmp.ne.s32.totalorder %v704, 0
      %vm725 = vcmp.ne.s32.totalorder %v711, 0
      %vm726 = vcmp.ne.s32.totalorder %v718, 0
      %vm727 = vcmp.lt.s32.totalorder %v669, 0
      %vm728 = vcmp.lt.s32.totalorder %v676, 0
      %vm729 = vcmp.lt.s32.totalorder %v683, 0
      %vm730 = vcmp.lt.s32.totalorder %v690, 0
      %vm731 = vcmp.lt.s32.totalorder %v697, 0
      %vm732 = vcmp.lt.s32.totalorder %v704, 0
      %vm733 = vcmp.lt.s32.totalorder %v711, 0
      %vm734 = vcmp.lt.s32.totalorder %v718, 0
      %vm735 = vmand %vm727, %vm719
      %vm736 = vmand %vm728, %vm720
      %vm737 = vmand %vm729, %vm721
      %vm738 = vmand %vm730, %vm722
      %vm739 = vmand %vm731, %vm723
      %vm740 = vmand %vm732, %vm724
      %vm741 = vmand %vm733, %vm725
      %vm742 = vmand %vm734, %vm726
      %v743 = vadd.s32 %v669, 8
      %v744 = vadd.s32 %v676, 8
      %v745 = vadd.s32 %v683, 8
      %v746 = vadd.s32 %v690, 8
      %v747 = vadd.s32 %v697, 8
      %v748 = vadd.s32 %v704, 8
      %v749 = vadd.s32 %v711, 8
      %v750 = vadd.s32 %v718, 8
      %v751 = vsel %vm735, %v743, %v669
      %v752 = vsel %vm736, %v744, %v676
      %v753 = vsel %vm737, %v745, %v683
      %v754 = vsel %vm738, %v746, %v690
      %v755 = vsel %vm739, %v747, %v697
      %v756 = vsel %vm740, %v748, %v704
      %v757 = vsel %vm741, %v749, %v711
      %v758 = vsel %vm742, %v750, %v718
      %vm759 = vcmp.ge.s32.totalorder %v655, 8
      %vm760 = vcmp.ge.s32.totalorder %v656, 8
      %vm761 = vcmp.ge.s32.totalorder %v657, 8
      %vm762 = vcmp.ge.s32.totalorder %v658, 8
      %vm763 = vcmp.ge.s32.totalorder %v659, 8
      %vm764 = vcmp.ge.s32.totalorder %v660, 8
      %vm765 = vcmp.ge.s32.totalorder %v661, 8
      %vm766 = vcmp.ge.s32.totalorder %v662, 8
      %vm767 = vcmp.lt.s32.totalorder %v655, 56
      %vm768 = vcmp.lt.s32.totalorder %v656, 56
      %vm769 = vcmp.lt.s32.totalorder %v657, 56
      %vm770 = vcmp.lt.s32.totalorder %v658, 56
      %vm771 = vcmp.lt.s32.totalorder %v659, 56
      %vm772 = vcmp.lt.s32.totalorder %v660, 56
      %vm773 = vcmp.lt.s32.totalorder %v661, 56
      %vm774 = vcmp.lt.s32.totalorder %v662, 56
      %vm775 = vcmp.ge.s32.totalorder %v751, 1
      %vm776 = vcmp.ge.s32.totalorder %v752, 1
      %vm777 = vcmp.ge.s32.totalorder %v753, 1
      %vm778 = vcmp.ge.s32.totalorder %v754, 1
      %vm779 = vcmp.ge.s32.totalorder %v755, 1
      %vm780 = vcmp.ge.s32.totalorder %v756, 1
      %vm781 = vcmp.ge.s32.totalorder %v757, 1
      %vm782 = vcmp.ge.s32.totalorder %v758, 1
      %vm783 = vcmp.le.s32.totalorder %v751, 6
      %vm784 = vcmp.le.s32.totalorder %v752, 6
      %vm785 = vcmp.le.s32.totalorder %v753, 6
      %vm786 = vcmp.le.s32.totalorder %v754, 6
      %vm787 = vcmp.le.s32.totalorder %v755, 6
      %vm788 = vcmp.le.s32.totalorder %v756, 6
      %vm789 = vcmp.le.s32.totalorder %v757, 6
      %vm790 = vcmp.le.s32.totalorder %v758, 6
      %v791 = vld [vmem:[%s4] sm:$0xff]
      %v792 = vld [vmem:[%s4 + $0x8] sm:$0x1]
      %v793 = vlaneseq
      %v794 = vshrl.u32 %v793, 7
      %v795 = vsub.s32 4, %v794
      %v796 = vrot.slane %v791, %v795
      %v797 = vmul.f32 %v516, %v796
      %v798 = vmul.f32 %v517, %v796
      %v799 = vmul.f32 %v518, %v796
      %v800 = vmul.f32 %v519, %v796
      %v801 = vmul.f32 %v520, %v796
      %v802 = vmul.f32 %v521, %v796
      %v803 = vmul.f32 %v522, %v796
      %v804 = vmul.f32 %v523, %v796
      %vm805 = vmand %vm759, %vm775
      %vm806 = vmand %vm760, %vm776
      %vm807 = vmand %vm761, %vm777
      %vm808 = vmand %vm762, %vm778
      %vm809 = vmand %vm763, %vm779
      %vm810 = vmand %vm764, %vm780
      %vm811 = vmand %vm765, %vm781
      %vm812 = vmand %vm766, %vm782
      %v813 = vsel %vm805, 1, 0
      %v814 = vsel %vm806, 1, 0
      %v815 = vsel %vm807, 1, 0
      %v816 = vsel %vm808, 1, 0
      %v817 = vsel %vm809, 1, 0
      %v818 = vsel %vm810, 1, 0
      %v819 = vsel %vm811, 1, 0
      %v820 = vsel %vm812, 1, 0
      %vm821 = vcmp.eq.s32.totalorder %v813, 1
      %vm822 = vcmp.eq.s32.totalorder %v814, 1
      %vm823 = vcmp.eq.s32.totalorder %v815, 1
      %vm824 = vcmp.eq.s32.totalorder %v816, 1
      %vm825 = vcmp.eq.s32.totalorder %v817, 1
      %vm826 = vcmp.eq.s32.totalorder %v818, 1
      %vm827 = vcmp.eq.s32.totalorder %v819, 1
      %vm828 = vcmp.eq.s32.totalorder %v820, 1
      %v829 = vsel %vm821, %v535, 0.0
      %v830 = vsel %vm822, %v542, 0.0
      %v831 = vsel %vm823, %v541, 0.0
      %v832 = vsel %vm824, %v540, 0.0
      %v833 = vsel %vm825, %v539, 0.0
      %v834 = vsel %vm826, %v538, 0.0
      %v835 = vsel %vm827, %v537, 0.0
      %v836 = vsel %vm828, %v536, 0.0
      %v837 = vlaneseq
      %v838 = vshrl.u32 %v837, 7
      %v839 = vsub.s32 0, %v838
      %v840 = vrot.slane %v791, %v839
      %v841 = vmul.f32 %v829, %v840
      %v842 = vmul.f32 %v830, %v840
      %v843 = vmul.f32 %v831, %v840
      %v844 = vmul.f32 %v832, %v840
      %v845 = vmul.f32 %v833, %v840
      %v846 = vmul.f32 %v834, %v840
      %v847 = vmul.f32 %v835, %v840
      %v848 = vmul.f32 %v836, %v840
      %v849 = vadd.f32 %v797, %v841
      %v850 = vadd.f32 %v798, %v842
      %v851 = vadd.f32 %v799, %v843
      %v852 = vadd.f32 %v800, %v844
      %v853 = vadd.f32 %v801, %v845
      %v854 = vadd.f32 %v802, %v846
      %v855 = vadd.f32 %v803, %v847
      %v856 = vadd.f32 %v804, %v848
      %v857 = vsel %vm759, 1, 0
      %v858 = vsel %vm760, 1, 0
      %v859 = vsel %vm761, 1, 0
      %v860 = vsel %vm762, 1, 0
      %v861 = vsel %vm763, 1, 0
      %v862 = vsel %vm764, 1, 0
      %v863 = vsel %vm765, 1, 0
      %v864 = vsel %vm766, 1, 0
      %vm865 = vcmp.eq.s32.totalorder %v857, 1
      %vm866 = vcmp.eq.s32.totalorder %v858, 1
      %vm867 = vcmp.eq.s32.totalorder %v859, 1
      %vm868 = vcmp.eq.s32.totalorder %v860, 1
      %vm869 = vcmp.eq.s32.totalorder %v861, 1
      %vm870 = vcmp.eq.s32.totalorder %v862, 1
      %vm871 = vcmp.eq.s32.totalorder %v863, 1
      %vm872 = vcmp.eq.s32.totalorder %v864, 1
      %v873 = vsel %vm865, %v523, 0.0
      %v874 = vsel %vm866, %v516, 0.0
      %v875 = vsel %vm867, %v517, 0.0
      %v876 = vsel %vm868, %v518, 0.0
      %v877 = vsel %vm869, %v519, 0.0
      %v878 = vsel %vm870, %v520, 0.0
      %v879 = vsel %vm871, %v521, 0.0
      %v880 = vsel %vm872, %v522, 0.0
      %v881 = vlaneseq
      %v882 = vshrl.u32 %v881, 7
      %v883 = vsub.s32 1, %v882
      %v884 = vrot.slane %v791, %v883
      %v885 = vmul.f32 %v873, %v884
      %v886 = vmul.f32 %v874, %v884
      %v887 = vmul.f32 %v875, %v884
      %v888 = vmul.f32 %v876, %v884
      %v889 = vmul.f32 %v877, %v884
      %v890 = vmul.f32 %v878, %v884
      %v891 = vmul.f32 %v879, %v884
      %v892 = vmul.f32 %v880, %v884
      %v893 = vadd.f32 %v849, %v885
      %v894 = vadd.f32 %v850, %v886
      %v895 = vadd.f32 %v851, %v887
      %v896 = vadd.f32 %v852, %v888
      %v897 = vadd.f32 %v853, %v889
      %v898 = vadd.f32 %v854, %v890
      %v899 = vadd.f32 %v855, %v891
      %v900 = vadd.f32 %v856, %v892
      %vm901 = vmand %vm759, %vm783
      %vm902 = vmand %vm760, %vm784
      %vm903 = vmand %vm761, %vm785
      %vm904 = vmand %vm762, %vm786
      %vm905 = vmand %vm763, %vm787
      %vm906 = vmand %vm764, %vm788
      %vm907 = vmand %vm765, %vm789
      %vm908 = vmand %vm766, %vm790
      %v909 = vsel %vm901, 1, 0
      %v910 = vsel %vm902, 1, 0
      %v911 = vsel %vm903, 1, 0
      %v912 = vsel %vm904, 1, 0
      %v913 = vsel %vm905, 1, 0
      %v914 = vsel %vm906, 1, 0
      %v915 = vsel %vm907, 1, 0
      %v916 = vsel %vm908, 1, 0
      %vm917 = vcmp.eq.s32.totalorder %v909, 1
      %vm918 = vcmp.eq.s32.totalorder %v910, 1
      %vm919 = vcmp.eq.s32.totalorder %v911, 1
      %vm920 = vcmp.eq.s32.totalorder %v912, 1
      %vm921 = vcmp.eq.s32.totalorder %v913, 1
      %vm922 = vcmp.eq.s32.totalorder %v914, 1
      %vm923 = vcmp.eq.s32.totalorder %v915, 1
      %vm924 = vcmp.eq.s32.totalorder %v916, 1
      %v925 = vsel %vm917, %v559, 0.0
      %v926 = vsel %vm918, %v558, 0.0
      %v927 = vsel %vm919, %v557, 0.0
      %v928 = vsel %vm920, %v556, 0.0
      %v929 = vsel %vm921, %v555, 0.0
      %v930 = vsel %vm922, %v554, 0.0
      %v931 = vsel %vm923, %v553, 0.0
      %v932 = vsel %vm924, %v552, 0.0
      %v933 = vlaneseq
      %v934 = vshrl.u32 %v933, 7
      %v935 = vsub.s32 2, %v934
      %v936 = vrot.slane %v791, %v935
      %v937 = vmul.f32 %v925, %v936
      %v938 = vmul.f32 %v926, %v936
      %v939 = vmul.f32 %v927, %v936
      %v940 = vmul.f32 %v928, %v936
      %v941 = vmul.f32 %v929, %v936
      %v942 = vmul.f32 %v930, %v936
      %v943 = vmul.f32 %v931, %v936
      %v944 = vmul.f32 %v932, %v936
      %v945 = vadd.f32 %v893, %v937
      %v946 = vadd.f32 %v894, %v938
      %v947 = vadd.f32 %v895, %v939
      %v948 = vadd.f32 %v896, %v940
      %v949 = vadd.f32 %v897, %v941
      %v950 = vadd.f32 %v898, %v942
      %v951 = vadd.f32 %v899, %v943
      %v952 = vadd.f32 %v900, %v944
      %v953 = vsel %vm775, 1, 0
      %v954 = vsel %vm776, 1, 0
      %v955 = vsel %vm777, 1, 0
      %v956 = vsel %vm778, 1, 0
      %v957 = vsel %vm779, 1, 0
      %v958 = vsel %vm780, 1, 0
      %v959 = vsel %vm781, 1, 0
      %v960 = vsel %vm782, 1, 0
      %vm961 = vcmp.eq.s32.totalorder %v953, 1
      %vm962 = vcmp.eq.s32.totalorder %v954, 1
      %vm963 = vcmp.eq.s32.totalorder %v955, 1
      %vm964 = vcmp.eq.s32.totalorder %v956, 1
      %vm965 = vcmp.eq.s32.totalorder %v957, 1
      %vm966 = vcmp.eq.s32.totalorder %v958, 1
      %vm967 = vcmp.eq.s32.totalorder %v959, 1
      %vm968 = vcmp.eq.s32.totalorder %v960, 1
      %v969 = vsel %vm961, %v542, 0.0
      %v970 = vsel %vm962, %v541, 0.0
      %v971 = vsel %vm963, %v540, 0.0
      %v972 = vsel %vm964, %v539, 0.0
      %v973 = vsel %vm965, %v538, 0.0
      %v974 = vsel %vm966, %v537, 0.0
      %v975 = vsel %vm967, %v536, 0.0
      %v976 = vsel %vm968, %v535, 0.0
      %v977 = vlaneseq
      %v978 = vshrl.u32 %v977, 7
      %v979 = vsub.s32 3, %v978
      %v980 = vrot.slane %v791, %v979
      %v981 = vmul.f32 %v969, %v980
      %v982 = vmul.f32 %v970, %v980
      %v983 = vmul.f32 %v971, %v980
      %v984 = vmul.f32 %v972, %v980
      %v985 = vmul.f32 %v973, %v980
      %v986 = vmul.f32 %v974, %v980
      %v987 = vmul.f32 %v975, %v980
      %v988 = vmul.f32 %v976, %v980
      %v989 = vadd.f32 %v945, %v981
      %v990 = vadd.f32 %v946, %v982
      %v991 = vadd.f32 %v947, %v983
      %v992 = vadd.f32 %v948, %v984
      %v993 = vadd.f32 %v949, %v985
      %v994 = vadd.f32 %v950, %v986
      %v995 = vadd.f32 %v951, %v987
      %v996 = vadd.f32 %v952, %v988
      %v997 = vsel %vm783, 1, 0
      %v998 = vsel %vm784, 1, 0
      %v999 = vsel %vm785, 1, 0
      %v1000 = vsel %vm786, 1, 0
      %v1001 = vsel %vm787, 1, 0
      %v1002 = vsel %vm788, 1, 0
      %v1003 = vsel %vm789, 1, 0
      %v1004 = vsel %vm790, 1, 0
      %vm1005 = vcmp.eq.s32.totalorder %v997, 1
      %vm1006 = vcmp.eq.s32.totalorder %v998, 1
      %vm1007 = vcmp.eq.s32.totalorder %v999, 1
      %vm1008 = vcmp.eq.s32.totalorder %v1000, 1
      %vm1009 = vcmp.eq.s32.totalorder %v1001, 1
      %vm1010 = vcmp.eq.s32.totalorder %v1002, 1
      %vm1011 = vcmp.eq.s32.totalorder %v1003, 1
      %vm1012 = vcmp.eq.s32.totalorder %v1004, 1
      %v1013 = vsel %vm1005, %v558, 0.0
      %v1014 = vsel %vm1006, %v557, 0.0
      %v1015 = vsel %vm1007, %v556, 0.0
      %v1016 = vsel %vm1008, %v555, 0.0
      %v1017 = vsel %vm1009, %v554, 0.0
      %v1018 = vsel %vm1010, %v553, 0.0
      %v1019 = vsel %vm1011, %v552, 0.0
      %v1020 = vsel %vm1012, %v559, 0.0
      %v1021 = vlaneseq
      %v1022 = vshrl.u32 %v1021, 7
      %v1023 = vsub.s32 5, %v1022
      %v1024 = vrot.slane %v791, %v1023
      %v1025 = vmul.f32 %v1013, %v1024
      %v1026 = vmul.f32 %v1014, %v1024
      %v1027 = vmul.f32 %v1015, %v1024
      %v1028 = vmul.f32 %v1016, %v1024
      %v1029 = vmul.f32 %v1017, %v1024
      %v1030 = vmul.f32 %v1018, %v1024
      %v1031 = vmul.f32 %v1019, %v1024
      %v1032 = vmul.f32 %v1020, %v1024
      %v1033 = vadd.f32 %v989, %v1025
      %v1034 = vadd.f32 %v990, %v1026
      %v1035 = vadd.f32 %v991, %v1027
      %v1036 = vadd.f32 %v992, %v1028
      %v1037 = vadd.f32 %v993, %v1029
      %v1038 = vadd.f32 %v994, %v1030
      %v1039 = vadd.f32 %v995, %v1031
      %v1040 = vadd.f32 %v996, %v1032
      %vm1041 = vmand %vm767, %vm775
      %vm1042 = vmand %vm768, %vm776
      %vm1043 = vmand %vm769, %vm777
      %vm1044 = vmand %vm770, %vm778
      %vm1045 = vmand %vm771, %vm779
      %vm1046 = vmand %vm772, %vm780
      %vm1047 = vmand %vm773, %vm781
      %vm1048 = vmand %vm774, %vm782
      %v1049 = vsel %vm1041, 1, 0
      %v1050 = vsel %vm1042, 1, 0
      %v1051 = vsel %vm1043, 1, 0
      %v1052 = vsel %vm1044, 1, 0
      %v1053 = vsel %vm1045, 1, 0
      %v1054 = vsel %vm1046, 1, 0
      %v1055 = vsel %vm1047, 1, 0
      %v1056 = vsel %vm1048, 1, 0
      %vm1057 = vcmp.eq.s32.totalorder %v1049, 1
      %vm1058 = vcmp.eq.s32.totalorder %v1050, 1
      %vm1059 = vcmp.eq.s32.totalorder %v1051, 1
      %vm1060 = vcmp.eq.s32.totalorder %v1052, 1
      %vm1061 = vcmp.eq.s32.totalorder %v1053, 1
      %vm1062 = vcmp.eq.s32.totalorder %v1054, 1
      %vm1063 = vcmp.eq.s32.totalorder %v1055, 1
      %vm1064 = vcmp.eq.s32.totalorder %v1056, 1
      %v1065 = vsel %vm1057, %v541, 0.0
      %v1066 = vsel %vm1058, %v540, 0.0
      %v1067 = vsel %vm1059, %v539, 0.0
      %v1068 = vsel %vm1060, %v538, 0.0
      %v1069 = vsel %vm1061, %v537, 0.0
      %v1070 = vsel %vm1062, %v536, 0.0
      %v1071 = vsel %vm1063, %v535, 0.0
      %v1072 = vsel %vm1064, %v542, 0.0
      %v1073 = vlaneseq
      %v1074 = vshrl.u32 %v1073, 7
      %v1075 = vsub.s32 6, %v1074
      %v1076 = vrot.slane %v791, %v1075
      %v1077 = vmul.f32 %v1065, %v1076
      %v1078 = vmul.f32 %v1066, %v1076
      %v1079 = vmul.f32 %v1067, %v1076
      %v1080 = vmul.f32 %v1068, %v1076
      %v1081 = vmul.f32 %v1069, %v1076
      %v1082 = vmul.f32 %v1070, %v1076
      %v1083 = vmul.f32 %v1071, %v1076
      %v1084 = vmul.f32 %v1072, %v1076
      %v1085 = vadd.f32 %v1033, %v1077
      %v1086 = vadd.f32 %v1034, %v1078
      %v1087 = vadd.f32 %v1035, %v1079
      %v1088 = vadd.f32 %v1036, %v1080
      %v1089 = vadd.f32 %v1037, %v1081
      %v1090 = vadd.f32 %v1038, %v1082
      %v1091 = vadd.f32 %v1039, %v1083
      %v1092 = vadd.f32 %v1040, %v1084
      %v1093 = vsel %vm767, 1, 0
      %v1094 = vsel %vm768, 1, 0
      %v1095 = vsel %vm769, 1, 0
      %v1096 = vsel %vm770, 1, 0
      %v1097 = vsel %vm771, 1, 0
      %v1098 = vsel %vm772, 1, 0
      %v1099 = vsel %vm773, 1, 0
      %v1100 = vsel %vm774, 1, 0
      %vm1101 = vcmp.eq.s32.totalorder %v1093, 1
      %vm1102 = vcmp.eq.s32.totalorder %v1094, 1
      %vm1103 = vcmp.eq.s32.totalorder %v1095, 1
      %vm1104 = vcmp.eq.s32.totalorder %v1096, 1
      %vm1105 = vcmp.eq.s32.totalorder %v1097, 1
      %vm1106 = vcmp.eq.s32.totalorder %v1098, 1
      %vm1107 = vcmp.eq.s32.totalorder %v1099, 1
      %vm1108 = vcmp.eq.s32.totalorder %v1100, 1
      %v1109 = vsel %vm1101, %v517, 0.0
      %v1110 = vsel %vm1102, %v518, 0.0
      %v1111 = vsel %vm1103, %v519, 0.0
      %v1112 = vsel %vm1104, %v520, 0.0
      %v1113 = vsel %vm1105, %v521, 0.0
      %v1114 = vsel %vm1106, %v522, 0.0
      %v1115 = vsel %vm1107, %v523, 0.0
      %v1116 = vsel %vm1108, %v516, 0.0
      %v1117 = vlaneseq
      %v1118 = vshrl.u32 %v1117, 7
      %v1119 = vsub.s32 7, %v1118
      %v1120 = vrot.slane %v791, %v1119
      %v1121 = vmul.f32 %v1109, %v1120
      %v1122 = vmul.f32 %v1110, %v1120
      %v1123 = vmul.f32 %v1111, %v1120
      %v1124 = vmul.f32 %v1112, %v1120
      %v1125 = vmul.f32 %v1113, %v1120
      %v1126 = vmul.f32 %v1114, %v1120
      %v1127 = vmul.f32 %v1115, %v1120
      %v1128 = vmul.f32 %v1116, %v1120
      %v1129 = vadd.f32 %v1085, %v1121
      %v1130 = vadd.f32 %v1086, %v1122
      %v1131 = vadd.f32 %v1087, %v1123
      %v1132 = vadd.f32 %v1088, %v1124
      %v1133 = vadd.f32 %v1089, %v1125
      %v1134 = vadd.f32 %v1090, %v1126
      %v1135 = vadd.f32 %v1091, %v1127
      %v1136 = vadd.f32 %v1092, %v1128
      %vm1137 = vmand %vm767, %vm783
      %vm1138 = vmand %vm768, %vm784
      %vm1139 = vmand %vm769, %vm785
      %vm1140 = vmand %vm770, %vm786
      %vm1141 = vmand %vm771, %vm787
      %vm1142 = vmand %vm772, %vm788
      %vm1143 = vmand %vm773, %vm789
      %vm1144 = vmand %vm774, %vm790
      %v1145 = vsel %vm1137, 1, 0
      %v1146 = vsel %vm1138, 1, 0
      %v1147 = vsel %vm1139, 1, 0
      %v1148 = vsel %vm1140, 1, 0
      %v1149 = vsel %vm1141, 1, 0
      %v1150 = vsel %vm1142, 1, 0
      %v1151 = vsel %vm1143, 1, 0
      %v1152 = vsel %vm1144, 1, 0
      %vm1153 = vcmp.eq.s32.totalorder %v1145, 1
      %vm1154 = vcmp.eq.s32.totalorder %v1146, 1
      %vm1155 = vcmp.eq.s32.totalorder %v1147, 1
      %vm1156 = vcmp.eq.s32.totalorder %v1148, 1
      %vm1157 = vcmp.eq.s32.totalorder %v1149, 1
      %vm1158 = vcmp.eq.s32.totalorder %v1150, 1
      %vm1159 = vcmp.eq.s32.totalorder %v1151, 1
      %vm1160 = vcmp.eq.s32.totalorder %v1152, 1
      %v1161 = vsel %vm1153, %v557, 0.0
      %v1162 = vsel %vm1154, %v556, 0.0
      %v1163 = vsel %vm1155, %v555, 0.0
      %v1164 = vsel %vm1156, %v554, 0.0
      %v1165 = vsel %vm1157, %v553, 0.0
      %v1166 = vsel %vm1158, %v552, 0.0
      %v1167 = vsel %vm1159, %v559, 0.0
      %v1168 = vsel %vm1160, %v558, 0.0
      %v1169 = vlaneseq
      %v1170 = vshrl.u32 %v1169, 7
      %v1171 = vsub.s32 0, %v1170
      %v1172 = vrot.slane %v792, %v1171
      %v1173 = vmul.f32 %v1161, %v1172
      %v1174 = vmul.f32 %v1162, %v1172
      %v1175 = vmul.f32 %v1163, %v1172
      %v1176 = vmul.f32 %v1164, %v1172
      %v1177 = vmul.f32 %v1165, %v1172
      %v1178 = vmul.f32 %v1166, %v1172
      %v1179 = vmul.f32 %v1167, %v1172
      %v1180 = vmul.f32 %v1168, %v1172
      %v1181 = vadd.f32 %v1129, %v1173
      %v1182 = vadd.f32 %v1130, %v1174
      %v1183 = vadd.f32 %v1131, %v1175
      %v1184 = vadd.f32 %v1132, %v1176
      %v1185 = vadd.f32 %v1133, %v1177
      %v1186 = vadd.f32 %v1134, %v1178
      %v1187 = vadd.f32 %v1135, %v1179
      %v1188 = vadd.f32 %v1136, %v1180
      %v1189 = vld [vmem:[%s5] sm:$0x1]
      %v1191 = vlaneseq
      %v1192 = vshrl.u32 %v1191, 7
      %v1193 = vsub.s32 0, %v1192
      %v1194 = vrot.slane %v1189, %v1193
      %v1196 = vadd.f32 %v1181, %v1194
      %v1197 = vadd.f32 %v1182, %v1194
      %v1198 = vadd.f32 %v1183, %v1194
      %v1199 = vadd.f32 %v1184, %v1194
      %v1200 = vadd.f32 %v1185, %v1194
      %v1201 = vadd.f32 %v1186, %v1194
      %v1202 = vadd.f32 %v1187, %v1194
      %v1203 = vadd.f32 %v1188, %v1194
      %vm1204 = vcmp.ge.f32.partialorder %v1196, 0.0
      %vm1205 = vcmp.ge.f32.partialorder %v1197, 0.0
      %vm1206 = vcmp.ge.f32.partialorder %v1198, 0.0
      %vm1207 = vcmp.ge.f32.partialorder %v1199, 0.0
      %vm1208 = vcmp.ge.f32.partialorder %v1200, 0.0
      %vm1209 = vcmp.ge.f32.partialorder %v1201, 0.0
      %vm1210 = vcmp.ge.f32.partialorder %v1202, 0.0
      %vm1211 = vcmp.ge.f32.partialorder %v1203, 0.0
      %v1212 = vld [vmem:[%s6] sm:$0x1]
      %v1214 = vlaneseq
      %v1215 = vshrl.u32 %v1214, 7
      %v1216 = vsub.s32 0, %v1215
      %v1217 = vrot.slane %v1212, %v1216
      %v1219 = vmul.f32 %v1217, %v1196
      %v1220 = vmul.f32 %v1217, %v1197
      %v1221 = vmul.f32 %v1217, %v1198
      %v1222 = vmul.f32 %v1217, %v1199
      %v1223 = vmul.f32 %v1217, %v1200
      %v1224 = vmul.f32 %v1217, %v1201
      %v1225 = vmul.f32 %v1217, %v1202
      %v1226 = vmul.f32 %v1217, %v1203
      %v1227 = vsel %vm1204, %v1196, %v1219
      %v1228 = vsel %vm1205, %v1197, %v1220
      %v1229 = vsel %vm1206, %v1198, %v1221
      %v1230 = vsel %vm1207, %v1199, %v1222
      %v1231 = vsel %vm1208, %v1200, %v1223
      %v1232 = vsel %vm1209, %v1201, %v1224
      %v1233 = vsel %vm1210, %v1202, %v1225
      %v1234 = vsel %vm1211, %v1203, %v1226
      %v1235 = vpack.c.bf16 %v1228, %v1227
      %v1236 = vpack.c.bf16 %v1230, %v1229
      %v1237 = vpack.c.bf16 %v1232, %v1231
      %v1238 = vpack.c.bf16 %v1234, %v1233
      %v1239 = vld [vmem:[%s7] sm:$0xf]
      %v1240 = vld [vmem:[%s7 + $0x4] sm:$0xf]
      %v1241 = vld [vmem:[%s7 + $0x8] sm:$0xf]
      %v1242 = vld [vmem:[%s7 + $0xc] sm:$0xf]
      %v1243 = vld [vmem:[%s8] sm:$0x1]
      %v1245 = vlaneseq
      %v1246 = vshrl.u32 %v1245, 7
      %v1247 = vsub.s32 0, %v1246
      %v1248 = vrot.slane %v1243, %v1247
      %v1254 = vunpack.c.l.b16 %v1239
      %v1255 = vunpack.c.l.b16 %v1240
      %v1256 = vunpack.c.l.b16 %v1241
      %v1257 = vunpack.c.l.b16 %v1242
      %v1258 = vpack.c.b16 %v1255, %v1254
      %v1259 = vpack.c.b16 %v1257, %v1256
      %vm1262 = vcmask 261120
      %v1264 = vsel %vm1262, %v1235, 0
      %v1267 = vsel %vm1262, %v1236, 0
      %v1270 = vsel %vm1262, %v1237, 0
      %v1273 = vsel %vm1262, %v1238, 0
      %1275 = vmatprep.subr.bf16.mxu0 0
      %1276 = vmatpush1.bf16.msra.mxu0 %v1258
      %1277 = vmatprep.subr.bf16.mxu0 0
      %1278 = vmatpush1.bf16.msra.mxu0 %v1259
      %1279 = vmatprep.subr.bf16.mxu0 0
      %1280 = vmatpush1.bf16.msra.mxu0 0
      %1281 = vmatprep.subr.bf16.mxu0 0
      %1282 = vmatpush1.bf16.msra.mxu0 0
      %1283 = vmatprep.subr.bf16.mxu0 0
      %1284 = vmatpush1.bf16.msra.mxu0 0
      %1285 = vmatprep.subr.bf16.mxu0 0
      %1286 = vmatpush1.bf16.msra.mxu0 0
      %1287 = vmatprep.subr.bf16.mxu0 0
      %1288 = vmatpush1.bf16.msra.mxu0 0
      %1289 = vmatprep.subr.bf16.mxu0 0
      %1290 = vmatpush1.bf16.msra.mxu0 0
      %1291 = vmatprep.subr.bf16.mxu0 0
      %1292 = vmatpush1.bf16.msra.mxu0 0
      %1293 = vmatprep.subr.bf16.mxu0 0
      %1294 = vmatpush1.bf16.msra.mxu0 0
      %1295 = vmatprep.subr.bf16.mxu0 0
      %1296 = vmatpush1.bf16.msra.mxu0 0
      %1297 = vmatprep.subr.bf16.mxu0 0
      %1298 = vmatpush1.bf16.msra.mxu0 0
      %1299 = vmatprep.subr.bf16.mxu0 0
      %1300 = vmatpush1.bf16.msra.mxu0 0
      %1301 = vmatprep.subr.bf16.mxu0 0
      %1302 = vmatpush1.bf16.msra.mxu0 0
      %1303 = vmatprep.subr.bf16.mxu0 0
      %1304 = vmatpush1.bf16.msra.mxu0 0
      %1305 = vmatprep.subr.bf16.mxu0 0
      %1306 = vmatpush1.bf16.msra.mxu0 0
      %1307 = vmatprep.mubr.bf16.mxu0 0
      %1308 = vmatmul.mubr.bf16.gmra.mrb[0].mxu0 %v1264
      %v1309 = vpop.f32.mrb[0].mxu0
      %v1310 = vadd.f32 %v1248, %v1309
      %v1311 = vpop.f32.mrb[0].mxu0
      %v1312 = vpop.f32.mrb[0].mxu0
      %v1313 = vadd.f32 %v1248, %v1312
      %v1314 = vpop.f32.mrb[0].mxu0
      %1315 = vmatprep.mubr.bf16.mxu0 0
      %1316 = vmatmul.mubr.bf16.gmra.mrb[0].mxu0 %v1267
      %v1317 = vpop.f32.mrb[0].mxu0
      %v1318 = vadd.f32 %v1248, %v1317
      %v1319 = vpop.f32.mrb[0].mxu0
      %v1320 = vpop.f32.mrb[0].mxu0
      %v1321 = vadd.f32 %v1248, %v1320
      %v1322 = vpop.f32.mrb[0].mxu0
      %1323 = vmatprep.mubr.bf16.mxu0 0
      %1324 = vmatmul.mubr.bf16.gmra.mrb[0].mxu0 %v1270
      %v1325 = vpop.f32.mrb[0].mxu0
      %v1326 = vadd.f32 %v1248, %v1325
      %v1327 = vpop.f32.mrb[0].mxu0
      %v1328 = vpop.f32.mrb[0].mxu0
      %v1329 = vadd.f32 %v1248, %v1328
      %v1330 = vpop.f32.mrb[0].mxu0
      %1331 = vmatprep.mubr.bf16.mxu0 0
      %1332 = vmatmul.mubr.bf16.gmra.mrb[0].mxu0 %v1273
      %v1333 = vpop.f32.mrb[0].mxu0
      %v1334 = vadd.f32 %v1248, %v1333
      %v1335 = vpop.f32.mrb[0].mxu0
      %v1336 = vpop.f32.mrb[0].mxu0
      %v1337 = vadd.f32 %v1248, %v1336
      %v1338 = vpop.f32.mrb[0].mxu0
      %1339 = vdwg.mxu0
      %v1340 = vsel %vm415, %v1310, 0.0
      %v1341 = vsel %vm415, %v1313, 0.0
      %v1342 = vadd.f32 %v1340, %v1341
      %v1343 = vsel %vm415, %v1318, 0.0
      %v1344 = vadd.f32 %v1342, %v1343
      %v1345 = vsel %vm415, %v1321, 0.0
      %v1346 = vadd.f32 %v1344, %v1345
      %v1347 = vsel %vm415, %v1326, 0.0
      %v1348 = vadd.f32 %v1346, %v1347
      %v1349 = vsel %vm415, %v1329, 0.0
      %v1350 = vadd.f32 %v1348, %v1349
      %v1351 = vsel %vm415, %v1334, 0.0
      %v1352 = vadd.f32 %v1350, %v1351
      %v1353 = vsel %vm415, %v1337, 0.0
      %v1354 = vadd.f32 %v1352, %v1353
      %v1355 = vrot.slane %v1354, 4
      %v1356 = vadd.f32 %v1354, %v1355
      %v1357 = vrot.slane %v1356, 2
      %v1358 = vadd.f32 %v1356, %v1357
      %v1359 = vrot.slane %v1358, 1
      %v1360 = vadd.f32 %v1358, %v1359
      %v1361 = vrcp.pop 64.0
      %v1362 = vmul.f32 %v1360, %v1361
      %v1363 = vld [vmem:[%s9] sm:$0xf]
      %v1364 = vmul.f32 %v1363, %v1362
      %vm1365 = vcmask 125952
      %v1366 = vsel %vm1365, %v1364, 0.0
      %1367 = vadd.xlane.f32.xlu0 %v1366
      %v1368 = vpop.xlane.xlu0 %1367
      %v1369 = vmax.f32 %v1368, 0.0
      %v1370 = vld [vmem:[%s10] sm:$0xf]
      %v1371 = vmul.f32 %v1370, %v1369
      %v1372 = vsel %vm1365, %v1371, 0.0
      %v1373 = vrot.slane %v1372, 4
      %v1374 = vadd.f32 %v1372, %v1373
      %v1375 = vrot.slane %v1374, 2
      %v1376 = vadd.f32 %v1374, %v1375
      %v1377 = vrot.slane %v1376, 1
      %v1378 = vadd.f32 %v1376, %v1377
      %v1379 = vxor.u32 %v1378, 2147483648
      %v1380 = vmul.f32 %v1379, 1.442695
      %v1381 = vpow.pop %v1380
      %v1382 = vadd.f32 %v1381, 1.0
      %v1383 = vrcp.pop %v1382
      %v1384 = vmul.f32 1.0, %v1383
      %v1385 = vmul.f32 %v1310, %v1384
      %v1386 = vmul.f32 %v1313, %v1384
      %v1387 = vmul.f32 %v1318, %v1384
      %v1388 = vmul.f32 %v1321, %v1384
      %v1389 = vmul.f32 %v1326, %v1384
      %v1390 = vmul.f32 %v1329, %v1384
      %v1391 = vmul.f32 %v1334, %v1384
      %v1392 = vmul.f32 %v1337, %v1384
      %v1393 = vadd.f32 %v388, %v1385
      %v1394 = vadd.f32 %v389, %v1386
      %v1395 = vadd.f32 %v390, %v1387
      %v1396 = vadd.f32 %v391, %v1388
      %v1397 = vadd.f32 %v392, %v1389
      %v1398 = vadd.f32 %v393, %v1390
      %v1399 = vadd.f32 %v394, %v1391
      %v1400 = vadd.f32 %v395, %v1392
      %1401 = vst.msk [vmem:[%s386] sm:$0xff] %vm415, %v1393
      %1402 = vst.msk [vmem:[%s386 + $0x8] sm:$0xff] %vm415, %v1394
      %1403 = vst.msk [vmem:[%s386 + $0x10] sm:$0xff] %vm415, %v1395
      %1404 = vst.msk [vmem:[%s386 + $0x18] sm:$0xff] %vm415, %v1396
      %1405 = vst.msk [vmem:[%s386 + $0x20] sm:$0xff] %vm415, %v1397
      %1406 = vst.msk [vmem:[%s386 + $0x28] sm:$0xff] %vm415, %v1398
      %1407 = vst.msk [vmem:[%s386 + $0x30] sm:$0xff] %vm415, %v1399
      %1408 = vst.msk [vmem:[%s386 + $0x38] sm:$0xff] %vm415, %v1400
      %p1409 = scmp.lt.s32.totalorder %s22, 3
      %s1410 = scalar_select %p1409, %s22, 3
      %s1411 = smul.addr %s1410, 8
      %s1412 = smul.addr %s1411, 8
      %s1413 = scalar_lea.vmem %s11, %s1412
      // Predicated region
      $region65: #{tpu_custom_call.1} parent=63 // pred_check
        %p1414 = pneg %p276
      $region66: #{tpu_custom_call.1} parent=63 // pred_check_branch
        %1416 = sbr.rel (%p1414) target = $region68
      $region67: #{tpu_custom_call.1} parent=63 // pred_region
        _
      $region68: #{tpu_custom_call.1} parent=63 // pred_fallthru
        _
    $region64: #{tpu_custom_call.1} parent=5 // pred_fallthru
      _
    %p1417 = scmp.le.s32.totalorder 2, %s17
    // Predicated region
    $region69: #{tpu_custom_call.1} parent=5 // pred_check
      %p1418 = pneg %p1417
    $region70: #{tpu_custom_call.1} parent=5 // pred_check_branch
      %1420 = sbr.rel (%p1418) target = $region72
    $region71: #{tpu_custom_call.1} parent=5 // pred_region
      %s1421 = ssub.s32 %s17, 2
      // Predicated region
      $region73: #{tpu_custom_call.1} parent=71 // pred_check
        %p1422 = pneg %p282
      $region74: #{tpu_custom_call.1} parent=71 // pred_check_branch
        %1424 = sbr.rel (%p1422) target = $region76
      $region75: #{tpu_custom_call.1} parent=71 // pred_region
        %p1425 = scmp.lt.s32.totalorder %s23, 3
        %s1426 = scalar_select %p1425, %s23, 3
        %s1427 = smul.addr %s1426, 8
        %s1428 = smul.addr %s1427, 8
        %s1429 = scalar_lea.vmem %s11, %s1428
      $region76: #{tpu_custom_call.1} parent=71 // pred_fallthru
        _
    $region72: #{tpu_custom_call.1} parent=5 // pred_fallthru
      _
  $region6: #{tpu_custom_call.1} parent=0 // loop_footer
    %s21 = sadd.s32 1, %s17
  $region7: #{tpu_custom_call.1} parent=0 // loop_footer_branch
    %16 = sbr.rel target = $region3
  $region8: #{tpu_custom_call.1} parent=0 // loop_exit
    _

</llo_original>
